<compile_context>
chip_gen: v5e
topology: v5e:2x2
jax: 0.10.0
libtpu: 0.0.40
codegen_flags: <defaults>
</compile_context>

<pallas_src>
import functools

import jax
import jax.numpy as jnp
from jax.experimental import pallas as pl
from jax.experimental.pallas import tpu as pltpu

ENC_DIMS = [28 * 28, 128, 64, 32, 16, 3]
DEC_DIMS = [3, 16, 32, 64, 128, 28 * 28]
LAYER_DIMS = list(zip(ENC_DIMS[:-1], ENC_DIMS[1:])) + list(zip(DEC_DIMS[:-1], DEC_DIMS[1:]))
N_LAYERS = len(LAYER_DIMS)            # 10 linear layers
D_IN = 28 * 28                        # 784 logical feature width
D_PAD = 896                           # 7 * 128 lane-dense padding of 784
H = 128                               # padded width of every hidden layer
ENC_LAYER = 4                         # encoder's final linear (no activation)
DEFAULT_TILE_B = 256                  # multiple of 256 for v6e/v7x MXU


def _round_up(n, m):
    return (n + m - 1) // m * m


# ----------------------------------------------------------------------------
# Kernel: whole 10-layer MLP chain on one (TILE_B, 896) activation tile.
# Inputs : x (TILE_B, 896) f32, w_first (896,128) bf16, w_mid (8,128,128) bf16,
#          w_last (128,896) bf16, b_stack (9,128) f32, b_last (1,896) f32.
# Outputs: encoded (TILE_B, 128) f32 (cols 3.. are zero),
#          decoded (TILE_B, 896) f32 (cols 784.. are padding).
# ----------------------------------------------------------------------------
def autoencoder_kernel(x_ref, w_first_ref, w_mid_ref, w_last_ref,
                       b_stack_ref, b_last_ref, enc_ref, dec_ref):
    def mm(h, w):
        # bf16 x bf16 MXU matmul with f32 accumulation.
        return jnp.dot(h.astype(jnp.bfloat16), w, preferred_element_type=jnp.float32)

    h = x_ref[...]                                                # (tb, 896) f32

    # layer 0: 896 -> 128, tanh
    h = jnp.tanh(mm(h, w_first_ref[...]) + b_stack_ref[0:1, :])

    # layers 1..8: all padded to 128 -> 128 (zero pad keeps math exact)
    for layer in range(1, 9):
        z = mm(h, w_mid_ref[layer - 1]) + b_stack_ref[layer:layer + 1, :]
        if layer == ENC_LAYER:       # encoder output: Linear, no activation
            h = z
            enc_ref[...] = z.astype(enc_ref.dtype)
        else:
            h = jnp.tanh(z)

    # layer 9: 128 -> 896, sigmoid via exp + approximate reciprocal (EUP slots)
    z = mm(h, w_last_ref[...]) + b_last_ref[...]
    dec_ref[...] = pl.reciprocal(1.0 + jnp.exp(-z), approx=True).astype(dec_ref.dtype)


# ----------------------------------------------------------------------------
# Parameter construction / packing
# ----------------------------------------------------------------------------
def make_params(key):
    """PyTorch-style init U(-1/sqrt(fan_in), 1/sqrt(fan_in)).

    Returns a list of (w, b) with w (in, out) stored in bf16 (the values the
    kernel actually computes with) and b (out,) in f32."""
    params = []
    for fan_in, fan_out in LAYER_DIMS:
        key, kw, kb = jax.random.split(key, 3)
        bound = float(1.0 / (fan_in ** 0.5))
        w = jax.random.uniform(kw, (fan_in, fan_out), jnp.float32, -bound, bound)
        b = jax.random.uniform(kb, (fan_out,), jnp.float32, -bound, bound)
        params.append((w.astype(jnp.bfloat16), b))
    return params


def pack_params(params):
    """Pack 10 (w, b) pairs into 5 lane-dense, zero-padded buffers."""
    w_first = jnp.zeros((D_PAD, H), jnp.bfloat16).at[:D_IN, :128].set(params[0][0])
    w_last = jnp.zeros((H, D_PAD), jnp.bfloat16).at[:128, :D_IN].set(params[9][0])
    b_last = jnp.zeros((1, D_PAD), jnp.float32).at[0, :D_IN].set(params[9][1])

    w_mid = jnp.zeros((8, H, H), jnp.bfloat16)
    b_stack = jnp.zeros((9, H), jnp.float32).at[0, :128].set(params[0][1])
    for layer in range(1, 9):
        w, b = params[layer]
        din, dout = w.shape
        w_mid = w_mid.at[layer - 1, :din, :dout].set(w)
        b_stack = b_stack.at[layer, :dout].set(b)
    return (w_first, w_mid, w_last, b_stack, b_last)


# ----------------------------------------------------------------------------
# Host wrapper: pad to lane-dense layout, grid over batch, slice back.
# ----------------------------------------------------------------------------
@functools.partial(jax.jit, static_argnames=("tile_b",))
def autoencoder_forward(x, packed, tile_b=DEFAULT_TILE_B):
    w_first, w_mid, w_last, b_stack, b_last = packed
    B = x.shape[0]
    tb = min(tile_b, _round_up(B, 8))          # sublane-aligned batch tile
    Bp = _round_up(B, tb)
    grid = (Bp // tb,)

    # Zero-pad batch (to tile) and features (784 -> 896, lane dense).
    xp = jnp.zeros((Bp, D_PAD), jnp.float32).at[:B, :D_IN].set(x.astype(jnp.float32))

    const2 = lambda i: (0, 0)
    const3 = lambda i: (0, 0, 0)

    param_bytes = (w_first.size + w_mid.size + w_last.size) * 2 \
        + (b_stack.size + b_last.size) * 4
    cost = pl.CostEstimate(
        flops=2 * Bp * (D_PAD * H + 8 * H * H + H * D_PAD),
        transcendentals=Bp * (8 * H + 2 * D_PAD),
        bytes_accessed=Bp * D_PAD * 4 + Bp * (H + D_PAD) * 4 + param_bytes,
    )

    enc_p, dec_p = pl.pallas_call(
        autoencoder_kernel,
        out_shape=(
            jax.ShapeDtypeStruct((Bp, H), jnp.float32),       # encoded (padded)
            jax.ShapeDtypeStruct((Bp, D_PAD), jnp.float32),   # decoded (padded)
        ),
        grid_spec=pltpu.PrefetchScalarGridSpec(
            num_scalar_prefetch=0,
            grid=grid,
            in_specs=[
                pl.BlockSpec((tb, D_PAD), lambda i: (i, 0)),      # x tile
                pl.BlockSpec((D_PAD, H), const2),                 # w_first (resident)
                pl.BlockSpec((8, H, H), const3),                  # w_mid   (resident)
                pl.BlockSpec((H, D_PAD), const2),                 # w_last  (resident)
                pl.BlockSpec((9, H), const2),                     # b_stack (resident)
                pl.BlockSpec((1, D_PAD), const2),                 # b_last  (resident)
            ],
            out_specs=(
                pl.BlockSpec((tb, H), lambda i: (i, 0)),
                pl.BlockSpec((tb, D_PAD), lambda i: (i, 0)),
            ),
        ),
        compiler_params=pltpu.CompilerParams(
            dimension_semantics=("parallel",),
            vmem_limit_bytes=32 * 1024 * 1024,
        ),
        cost_estimate=cost,
    )(xp, w_first, w_mid, w_last, b_stack, b_last)

    # Slice back to logical shapes.
    return enc_p[:B, :ENC_DIMS[-1]], dec_p[:B, :D_IN]


# ----------------------------------------------------------------------------
# Pure-JAX reference (same bf16 weights / bf16 dot inputs, f32 accumulation)
# ----------------------------------------------------------------------------
def reference_forward(x, params):
    h = x.astype(jnp.float32)
    enc = None
    for idx, (w, b) in enumerate(params):
        z = jnp.dot(h.astype(jnp.bfloat16), w, preferred_element_type=jnp.float32) + b
        if idx == ENC_LAYER:
            enc = z
            h = z
        elif idx == N_LAYERS - 1:
            h = jax.nn.sigmoid(z)
        else:
            h = jnp.tanh(z)
    return enc, h


if __name__ == "__main__":
    key = jax.random.PRNGKey(0)
    key, kx, kp = jax.random.split(key, 3)

    B = 8
    x = jax.random.uniform(kx, (B, D_IN), jnp.float32)   # flattened MNIST-like input
    params = make_params(kp)
    packed = pack_params(params)

    encoded, decoded = autoencoder_forward(x, packed)
    jax.block_until_ready((encoded, decoded))

    ref_enc, ref_dec = reference_forward(x, params)
    assert encoded.shape == (B, ENC_DIMS[-1]) and decoded.shape == (B, D_IN)
    assert jnp.allclose(encoded, ref_enc, atol=2e-3, rtol=2e-3)
    # decoded tolerance covers the approximate-reciprocal sigmoid
    assert jnp.allclose(decoded, ref_dec, atol=5e-3, rtol=5e-3)

    print("KERNEL_OK")
</pallas_src>

<mosaic_0001>
module attributes {stable_mosaic.version = 11 : i64} {
  func.func @autoencoder_kernel(%arg0: i32, %arg1: memref<8x896xf32, #tpu.memory_space<vmem>>, %arg2: memref<896x128xbf16, #tpu.memory_space<vmem>>, %arg3: memref<8x128x128xbf16, #tpu.memory_space<vmem>>, %arg4: memref<128x896xbf16, #tpu.memory_space<vmem>>, %arg5: memref<9x128xf32, #tpu.memory_space<vmem>>, %arg6: memref<1x896xf32, #tpu.memory_space<vmem>>, %arg7: memref<8x128xf32, #tpu.memory_space<vmem>>, %arg8: memref<8x896xf32, #tpu.memory_space<vmem>>) attributes {dimension_semantics = [#tpu.dimension_semantics<parallel>], iteration_bounds = array<i64: 1>, scalar_prefetch = 0 : i64, scratch_operands = 0 : i64, tpu.core_type = #tpu.core_type<tc>, window_params = [{transform_indices = @transform_0, window_bounds = array<i64: 8, 896>}, {pipeline_mode = #tpu.pipeline_mode<synchronous>, transform_indices = @transform_1, window_bounds = array<i64: 896, 128>}, {pipeline_mode = #tpu.pipeline_mode<synchronous>, transform_indices = @transform_2, window_bounds = array<i64: 8, 128, 128>}, {pipeline_mode = #tpu.pipeline_mode<synchronous>, transform_indices = @transform_3, window_bounds = array<i64: 128, 896>}, {pipeline_mode = #tpu.pipeline_mode<synchronous>, transform_indices = @transform_4, window_bounds = array<i64: 9, 128>}, {pipeline_mode = #tpu.pipeline_mode<synchronous>, transform_indices = @transform_5, window_bounds = array<i64: 1, 896>}, {transform_indices = @transform_6, window_bounds = array<i64: 8, 128>}, {transform_indices = @transform_7, window_bounds = array<i64: 8, 896>}]} {
    %c0 = arith.constant 0 : index
    %c0_0 = arith.constant 0 : index
    %0 = vector.load %arg1[%c0, %c0_0] : memref<8x896xf32, #tpu.memory_space<vmem>>, vector<8x896xf32>
    %c0_1 = arith.constant 0 : index
    %c0_2 = arith.constant 0 : index
    %1 = vector.load %arg2[%c0_1, %c0_2] : memref<896x128xbf16, #tpu.memory_space<vmem>>, vector<896x128xbf16>
    %2 = arith.truncf %0 : vector<8x896xf32> to vector<8x896xbf16>
    %cst = arith.constant dense<0.000000e+00> : vector<8x128xf32>
    %3 = tpu.matmul %2, %1, %cst {dimension_numbers = #tpu.dot_dimension_numbers<[1], [0], [0], [1], [0, 0, 1, 1], [], []>} : vector<8x896xbf16>, vector<896x128xbf16>, vector<8x128xf32> -> vector<8x128xf32>
    %c0_3 = arith.constant 0 : index
    %c0_4 = arith.constant 0 : index
    %4 = vector.load %arg5[%c0_3, %c0_4] : memref<9x128xf32, #tpu.memory_space<vmem>>, vector<1x128xf32>
    %5 = vector.broadcast %4 : vector<1x128xf32> to vector<8x128xf32>
    %6 = arith.addf %3, %5 : vector<8x128xf32>
    %7 = math.tanh %6 : vector<8x128xf32>
    %c0_5 = arith.constant 0 : index
    %c0_6 = arith.constant 0 : index
    %c0_7 = arith.constant 0 : index
    %8 = vector.load %arg3[%c0_5, %c0_6, %c0_7] : memref<8x128x128xbf16, #tpu.memory_space<vmem>>, vector<1x128x128xbf16>
    %9 = vector.shape_cast %8 : vector<1x128x128xbf16> to vector<128x128xbf16>
    %10 = arith.truncf %7 : vector<8x128xf32> to vector<8x128xbf16>
    %cst_8 = arith.constant dense<0.000000e+00> : vector<8x128xf32>
    %11 = tpu.matmul %10, %9, %cst_8 {dimension_numbers = #tpu.dot_dimension_numbers<[1], [0], [0], [1], [0, 0, 1, 1], [], []>} : vector<8x128xbf16>, vector<128x128xbf16>, vector<8x128xf32> -> vector<8x128xf32>
    %c1 = arith.constant 1 : index
    %c0_9 = arith.constant 0 : index
    %12 = vector.load %arg5[%c1, %c0_9] : memref<9x128xf32, #tpu.memory_space<vmem>>, vector<1x128xf32>
    %13 = vector.broadcast %12 : vector<1x128xf32> to vector<8x128xf32>
    %14 = arith.addf %11, %13 : vector<8x128xf32>
    %15 = math.tanh %14 : vector<8x128xf32>
    %c1_10 = arith.constant 1 : index
    %c0_11 = arith.constant 0 : index
    %c0_12 = arith.constant 0 : index
    %16 = vector.load %arg3[%c1_10, %c0_11, %c0_12] : memref<8x128x128xbf16, #tpu.memory_space<vmem>>, vector<1x128x128xbf16>
    %17 = vector.shape_cast %16 : vector<1x128x128xbf16> to vector<128x128xbf16>
    %18 = arith.truncf %15 : vector<8x128xf32> to vector<8x128xbf16>
    %cst_13 = arith.constant dense<0.000000e+00> : vector<8x128xf32>
    %19 = tpu.matmul %18, %17, %cst_13 {dimension_numbers = #tpu.dot_dimension_numbers<[1], [0], [0], [1], [0, 0, 1, 1], [], []>} : vector<8x128xbf16>, vector<128x128xbf16>, vector<8x128xf32> -> vector<8x128xf32>
    %c2 = arith.constant 2 : index
    %c0_14 = arith.constant 0 : index
    %20 = vector.load %arg5[%c2, %c0_14] : memref<9x128xf32, #tpu.memory_space<vmem>>, vector<1x128xf32>
    %21 = vector.broadcast %20 : vector<1x128xf32> to vector<8x128xf32>
    %22 = arith.addf %19, %21 : vector<8x128xf32>
    %23 = math.tanh %22 : vector<8x128xf32>
    %c2_15 = arith.constant 2 : index
    %c0_16 = arith.constant 0 : index
    %c0_17 = arith.constant 0 : index
    %24 = vector.load %arg3[%c2_15, %c0_16, %c0_17] : memref<8x128x128xbf16, #tpu.memory_space<vmem>>, vector<1x128x128xbf16>
    %25 = vector.shape_cast %24 : vector<1x128x128xbf16> to vector<128x128xbf16>
    %26 = arith.truncf %23 : vector<8x128xf32> to vector<8x128xbf16>
    %cst_18 = arith.constant dense<0.000000e+00> : vector<8x128xf32>
    %27 = tpu.matmul %26, %25, %cst_18 {dimension_numbers = #tpu.dot_dimension_numbers<[1], [0], [0], [1], [0, 0, 1, 1], [], []>} : vector<8x128xbf16>, vector<128x128xbf16>, vector<8x128xf32> -> vector<8x128xf32>
    %c3 = arith.constant 3 : index
    %c0_19 = arith.constant 0 : index
    %28 = vector.load %arg5[%c3, %c0_19] : memref<9x128xf32, #tpu.memory_space<vmem>>, vector<1x128xf32>
    %29 = vector.broadcast %28 : vector<1x128xf32> to vector<8x128xf32>
    %30 = arith.addf %27, %29 : vector<8x128xf32>
    %31 = math.tanh %30 : vector<8x128xf32>
    %c3_20 = arith.constant 3 : index
    %c0_21 = arith.constant 0 : index
    %c0_22 = arith.constant 0 : index
    %32 = vector.load %arg3[%c3_20, %c0_21, %c0_22] : memref<8x128x128xbf16, #tpu.memory_space<vmem>>, vector<1x128x128xbf16>
    %33 = vector.shape_cast %32 : vector<1x128x128xbf16> to vector<128x128xbf16>
    %34 = arith.truncf %31 : vector<8x128xf32> to vector<8x128xbf16>
    %cst_23 = arith.constant dense<0.000000e+00> : vector<8x128xf32>
    %35 = tpu.matmul %34, %33, %cst_23 {dimension_numbers = #tpu.dot_dimension_numbers<[1], [0], [0], [1], [0, 0, 1, 1], [], []>} : vector<8x128xbf16>, vector<128x128xbf16>, vector<8x128xf32> -> vector<8x128xf32>
    %c4 = arith.constant 4 : index
    %c0_24 = arith.constant 0 : index
    %36 = vector.load %arg5[%c4, %c0_24] : memref<9x128xf32, #tpu.memory_space<vmem>>, vector<1x128xf32>
    %37 = vector.broadcast %36 : vector<1x128xf32> to vector<8x128xf32>
    %38 = arith.addf %35, %37 : vector<8x128xf32>
    %c0_25 = arith.constant 0 : index
    %c0_26 = arith.constant 0 : index
    %39 = vector.load %arg7[%c0_25, %c0_26] : memref<8x128xf32, #tpu.memory_space<vmem>>, vector<8x128xf32>
    tpu.vector_store %arg7[%c0_25, %c0_26], %38 {strides = array<i32>} : memref<8x128xf32, #tpu.memory_space<vmem>>, vector<8x128xf32>,
    %c4_27 = arith.constant 4 : index
    %c0_28 = arith.constant 0 : index
    %c0_29 = arith.constant 0 : index
    %40 = vector.load %arg3[%c4_27, %c0_28, %c0_29] : memref<8x128x128xbf16, #tpu.memory_space<vmem>>, vector<1x128x128xbf16>
    %41 = vector.shape_cast %40 : vector<1x128x128xbf16> to vector<128x128xbf16>
    %42 = arith.truncf %38 : vector<8x128xf32> to vector<8x128xbf16>
    %cst_30 = arith.constant dense<0.000000e+00> : vector<8x128xf32>
    %43 = tpu.matmul %42, %41, %cst_30 {dimension_numbers = #tpu.dot_dimension_numbers<[1], [0], [0], [1], [0, 0, 1, 1], [], []>} : vector<8x128xbf16>, vector<128x128xbf16>, vector<8x128xf32> -> vector<8x128xf32>
    %c5 = arith.constant 5 : index
    %c0_31 = arith.constant 0 : index
    %44 = vector.load %arg5[%c5, %c0_31] : memref<9x128xf32, #tpu.memory_space<vmem>>, vector<1x128xf32>
    %45 = vector.broadcast %44 : vector<1x128xf32> to vector<8x128xf32>
    %46 = arith.addf %43, %45 : vector<8x128xf32>
    %47 = math.tanh %46 : vector<8x128xf32>
    %c5_32 = arith.constant 5 : index
    %c0_33 = arith.constant 0 : index
    %c0_34 = arith.constant 0 : index
    %48 = vector.load %arg3[%c5_32, %c0_33, %c0_34] : memref<8x128x128xbf16, #tpu.memory_space<vmem>>, vector<1x128x128xbf16>
    %49 = vector.shape_cast %48 : vector<1x128x128xbf16> to vector<128x128xbf16>
    %50 = arith.truncf %47 : vector<8x128xf32> to vector<8x128xbf16>
    %cst_35 = arith.constant dense<0.000000e+00> : vector<8x128xf32>
    %51 = tpu.matmul %50, %49, %cst_35 {dimension_numbers = #tpu.dot_dimension_numbers<[1], [0], [0], [1], [0, 0, 1, 1], [], []>} : vector<8x128xbf16>, vector<128x128xbf16>, vector<8x128xf32> -> vector<8x128xf32>
    %c6 = arith.constant 6 : index
    %c0_36 = arith.constant 0 : index
    %52 = vector.load %arg5[%c6, %c0_36] : memref<9x128xf32, #tpu.memory_space<vmem>>, vector<1x128xf32>
    %53 = vector.broadcast %52 : vector<1x128xf32> to vector<8x128xf32>
    %54 = arith.addf %51, %53 : vector<8x128xf32>
    %55 = math.tanh %54 : vector<8x128xf32>
    %c6_37 = arith.constant 6 : index
    %c0_38 = arith.constant 0 : index
    %c0_39 = arith.constant 0 : index
    %56 = vector.load %arg3[%c6_37, %c0_38, %c0_39] : memref<8x128x128xbf16, #tpu.memory_space<vmem>>, vector<1x128x128xbf16>
    %57 = vector.shape_cast %56 : vector<1x128x128xbf16> to vector<128x128xbf16>
    %58 = arith.truncf %55 : vector<8x128xf32> to vector<8x128xbf16>
    %cst_40 = arith.constant dense<0.000000e+00> : vector<8x128xf32>
    %59 = tpu.matmul %58, %57, %cst_40 {dimension_numbers = #tpu.dot_dimension_numbers<[1], [0], [0], [1], [0, 0, 1, 1], [], []>} : vector<8x128xbf16>, vector<128x128xbf16>, vector<8x128xf32> -> vector<8x128xf32>
    %c7 = arith.constant 7 : index
    %c0_41 = arith.constant 0 : index
    %60 = vector.load %arg5[%c7, %c0_41] : memref<9x128xf32, #tpu.memory_space<vmem>>, vector<1x128xf32>
    %61 = vector.broadcast %60 : vector<1x128xf32> to vector<8x128xf32>
    %62 = arith.addf %59, %61 : vector<8x128xf32>
    %63 = math.tanh %62 : vector<8x128xf32>
    %c7_42 = arith.constant 7 : index
    %c0_43 = arith.constant 0 : index
    %c0_44 = arith.constant 0 : index
    %64 = vector.load %arg3[%c7_42, %c0_43, %c0_44] : memref<8x128x128xbf16, #tpu.memory_space<vmem>>, vector<1x128x128xbf16>
    %65 = vector.shape_cast %64 : vector<1x128x128xbf16> to vector<128x128xbf16>
    %66 = arith.truncf %63 : vector<8x128xf32> to vector<8x128xbf16>
    %cst_45 = arith.constant dense<0.000000e+00> : vector<8x128xf32>
    %67 = tpu.matmul %66, %65, %cst_45 {dimension_numbers = #tpu.dot_dimension_numbers<[1], [0], [0], [1], [0, 0, 1, 1], [], []>} : vector<8x128xbf16>, vector<128x128xbf16>, vector<8x128xf32> -> vector<8x128xf32>
    %c8 = arith.constant 8 : index
    %c0_46 = arith.constant 0 : index
    %68 = vector.load %arg5[%c8, %c0_46] : memref<9x128xf32, #tpu.memory_space<vmem>>, vector<1x128xf32>
    %69 = vector.broadcast %68 : vector<1x128xf32> to vector<8x128xf32>
    %70 = arith.addf %67, %69 : vector<8x128xf32>
    %71 = math.tanh %70 : vector<8x128xf32>
    %c0_47 = arith.constant 0 : index
    %c0_48 = arith.constant 0 : index
    %72 = vector.load %arg4[%c0_47, %c0_48] : memref<128x896xbf16, #tpu.memory_space<vmem>>, vector<128x896xbf16>
    %73 = arith.truncf %71 : vector<8x128xf32> to vector<8x128xbf16>
    %cst_49 = arith.constant dense<0.000000e+00> : vector<8x896xf32>
    %74 = tpu.matmul %73, %72, %cst_49 {dimension_numbers = #tpu.dot_dimension_numbers<[1], [0], [0], [1], [0, 0, 1, 1], [], []>} : vector<8x128xbf16>, vector<128x896xbf16>, vector<8x896xf32> -> vector<8x896xf32>
    %c0_50 = arith.constant 0 : index
    %c0_51 = arith.constant 0 : index
    %75 = vector.load %arg6[%c0_50, %c0_51] : memref<1x896xf32, #tpu.memory_space<vmem>>, vector<1x896xf32>
    %76 = vector.broadcast %75 : vector<1x896xf32> to vector<8x896xf32>
    %77 = arith.addf %74, %76 : vector<8x896xf32>
    %cst_52 = arith.constant 0.000000e+00 : f32
    %78 = vector.broadcast %cst_52 : f32 to vector<8x896xf32>
    %79 = arith.subf %78, %77 : vector<8x896xf32>
    %80 = math.exp %79 : vector<8x896xf32>
    %cst_53 = arith.constant 1.000000e+00 : f32
    %81 = vector.broadcast %cst_53 : f32 to vector<8x896xf32>
    %82 = arith.addf %81, %80 : vector<8x896xf32>
    %83 = tpu.reciprocal %82 {approx = true} : vector<8x896xf32> -> vector<8x896xf32>
    %c0_54 = arith.constant 0 : index
    %c0_55 = arith.constant 0 : index
    %84 = vector.load %arg8[%c0_54, %c0_55] : memref<8x896xf32, #tpu.memory_space<vmem>>, vector<8x896xf32>
    tpu.vector_store %arg8[%c0_54, %c0_55], %83 {strides = array<i32>} : memref<8x896xf32, #tpu.memory_space<vmem>>, vector<8x896xf32>,
    return
  }
  func.func @transform_0(%arg0: i32) -> (i32, i32) {
    %c0_i32 = arith.constant 0 : i32
    %c0_i32_0 = arith.constant 0 : i32
    return %arg0, %c0_i32 : i32, i32
  }
  func.func @transform_1(%arg0: i32) -> (i32, i32) {
    %c0_i32 = arith.constant 0 : i32
    %c0_i32_0 = arith.constant 0 : i32
    %c0_i32_1 = arith.constant 0 : i32
    return %c0_i32, %c0_i32_0 : i32, i32
  }
  func.func @transform_2(%arg0: i32) -> (i32, i32, i32) {
    %c0_i32 = arith.constant 0 : i32
    %c0_i32_0 = arith.constant 0 : i32
    %c0_i32_1 = arith.constant 0 : i32
    %c0_i32_2 = arith.constant 0 : i32
    return %c0_i32, %c0_i32_0, %c0_i32_1 : i32, i32, i32
  }
  func.func @transform_3(%arg0: i32) -> (i32, i32) {
    %c0_i32 = arith.constant 0 : i32
    %c0_i32_0 = arith.constant 0 : i32
    %c0_i32_1 = arith.constant 0 : i32
    return %c0_i32, %c0_i32_0 : i32, i32
  }
  func.func @transform_4(%arg0: i32) -> (i32, i32) {
    %c0_i32 = arith.constant 0 : i32
    %c0_i32_0 = arith.constant 0 : i32
    %c0_i32_1 = arith.constant 0 : i32
    return %c0_i32, %c0_i32_0 : i32, i32
  }
  func.func @transform_5(%arg0: i32) -> (i32, i32) {
    %c0_i32 = arith.constant 0 : i32
    %c0_i32_0 = arith.constant 0 : i32
    %c0_i32_1 = arith.constant 0 : i32
    return %c0_i32, %c0_i32_0 : i32, i32
  }
  func.func @transform_6(%arg0: i32) -> (i32, i32) {
    %c0_i32 = arith.constant 0 : i32
    %c0_i32_0 = arith.constant 0 : i32
    return %arg0, %c0_i32 : i32, i32
  }
  func.func @transform_7(%arg0: i32) -> (i32, i32) {
    %c0_i32 = arith.constant 0 : i32
    %c0_i32_0 = arith.constant 0 : i32
    return %arg0, %c0_i32 : i32, i32
  }
}

</mosaic_0001>

<llo_original>
// kernel: autoencoder_forward.1
$region0: #{autoencoder_forward.1}
  #allocation0 [shape = 'u32[]', space=smem, size = 0x4, offset = 0x4, fixed_abs, tag = 'smem constant byte address 0x4 - core index']
  #allocation1 [shape = 'u32[72,128]{1,0:T(1,128)}', space=vmem, size = 0x9000, scoped, tag = 'internal scratch']
  %s0 = inlined_call_operand.vmem [shape: f32[8,896], index: 0, kind: input, shape index: {}]
  %s1 = inlined_call_operand.hbm [shape: bf16[896,128], index: 1, kind: input, shape index: {}]
  %s2 = inlined_call_operand.hbm [shape: bf16[8,128,128], index: 2, kind: input, shape index: {}]
  %s3 = inlined_call_operand.hbm [shape: bf16[128,896], index: 3, kind: input, shape index: {}]
  %s4 = inlined_call_operand.vmem [shape: f32[9,128], index: 4, kind: input, shape index: {}]
  %s5 = inlined_call_operand.vmem [shape: f32[1,896], index: 5, kind: input, shape index: {}]
  %s6 = inlined_call_operand.vmem [shape: f32[8,128], index: 6, kind: output, shape index: {0}]
  %s7 = inlined_call_operand.hbm [shape: f32[8,896], index: 7, kind: output, shape index: {1}]
  %8 = xla_tuple %s6, %s7
  %s9 = sld [smem:[#allocation0]]
  $region54: #{autoencoder_forward.1} parent=0
    _
  %s11 = ssub.s32 1, %s9
  %s12 = scalar_select 0, %s11, %s9
  $region1: #{autoencoder_forward.1} parent=0
    #allocation2 [shape = 'u8[229376]{0}', space=vmem, size = 0x38000, scoped, tag = 'input window, operand 1, single buffered']
    #allocation3 [shape = 's32[1]{0}', space=sflag, size = 0x4, scoped, tag = 'scoped memory for autoencoder_forward.1']
    #allocation4 [shape = 's32[1]{0}', space=sflag, size = 0x4, scoped, tag = 'scoped memory for autoencoder_forward.1']
    #allocation5 [shape = 'u8[262144]{0}', space=vmem, size = 0x40000, scoped, tag = 'input window, operand 2, single buffered']
    #allocation6 [shape = 's32[1]{0}', space=sflag, size = 0x4, scoped, tag = 'scoped memory for autoencoder_forward.1']
    #allocation7 [shape = 'u8[229376]{0}', space=vmem, size = 0x38000, scoped, tag = 'input window, operand 3, single buffered']
    #allocation8 [shape = 'u8[28672]{0}', space=vmem, size = 0x7000, scoped, tag = 'output window, operand 1, single buffered']
    %13 = vsyncpa [#allocation3], 0
    %14 = vsyncpa [#allocation6], 0
    %15 = vsyncpa [#allocation4], 0
    // Predicated region
    $region2: #{autoencoder_forward.1} parent=1 // pred_check
      _
    $region3: #{autoencoder_forward.1} parent=1 // pred_check_branch
      %17 = sbr.rel (0) target = $region5
    $region4: #{autoencoder_forward.1} parent=1 // pred_region
      _
    $region5: #{autoencoder_forward.1} parent=1 // pred_fallthru
      _
    // Predicated region
    $region6: #{autoencoder_forward.1} parent=1 // pred_check
      _
    $region7: #{autoencoder_forward.1} parent=1 // pred_check_branch
      %19 = sbr.rel (0) target = $region9
    $region8: #{autoencoder_forward.1} parent=1 // pred_region
      %21 = vsyncadd [#allocation3], 0
      %s22 = sshll.u32 %s1, 4
      %s23 = int_to_ptr.hbm [resolvable:$true] %s22
      %s24 = sshll.u32 [#allocation2], 4
      %s25 = int_to_ptr.vmem [resolvable:$true] %s24
      %30 = dma.hbm_to_vmem [thread:$0]  %s23, 7168, %s25, [#allocation3], 64, 64, 4
    $region9: #{autoencoder_forward.1} parent=1 // pred_fallthru
      _
    // Predicated region
    $region10: #{autoencoder_forward.1} parent=1 // pred_check
      _
    $region11: #{autoencoder_forward.1} parent=1 // pred_check_branch
      %32 = sbr.rel (0) target = $region13
    $region12: #{autoencoder_forward.1} parent=1 // pred_region
      %34 = vsyncadd [#allocation6], 0
      %s35 = sshll.u32 %s2, 4
      %s36 = int_to_ptr.hbm [resolvable:$true] %s35
      %s37 = sshll.u32 [#allocation5], 4
      %s38 = int_to_ptr.vmem [resolvable:$true] %s37
      %43 = dma.hbm_to_vmem [thread:$0]  %s36, 8192, %s38, [#allocation6], 64, 64, 4
    $region13: #{autoencoder_forward.1} parent=1 // pred_fallthru
      _
    // Predicated region
    $region14: #{autoencoder_forward.1} parent=1 // pred_check
      _
    $region15: #{autoencoder_forward.1} parent=1 // pred_check_branch
      %45 = sbr.rel (0) target = $region17
    $region16: #{autoencoder_forward.1} parent=1 // pred_region
      %47 = vsyncadd [#allocation6], 0
      %s48 = sshll.u32 %s3, 4
      %s49 = int_to_ptr.hbm [resolvable:$true] %s48
      %s50 = sshll.u32 [#allocation7], 4
      %s51 = int_to_ptr.vmem [resolvable:$true] %s50
      %56 = dma.hbm_to_vmem [thread:$0]  %s49, 7168, %s51, [#allocation6], 448, 448, 28
    $region17: #{autoencoder_forward.1} parent=1 // pred_fallthru
      _
    // Predicated region
    $region18: #{autoencoder_forward.1} parent=1 // pred_check
      _
    $region19: #{autoencoder_forward.1} parent=1 // pred_check_branch
      %58 = sbr.rel (0) target = $region21
    $region20: #{autoencoder_forward.1} parent=1 // pred_region
      _
    $region21: #{autoencoder_forward.1} parent=1 // pred_fallthru
      _
    // Predicated region
    $region22: #{autoencoder_forward.1} parent=1 // pred_check
      _
    $region23: #{autoencoder_forward.1} parent=1 // pred_check_branch
      %60 = sbr.rel (0) target = $region25
    $region24: #{autoencoder_forward.1} parent=1 // pred_region
      _
    $region25: #{autoencoder_forward.1} parent=1 // pred_fallthru
      _
    // Predicated region
    $region26: #{autoencoder_forward.1} parent=1 // pred_check
      _
    $region27: #{autoencoder_forward.1} parent=1 // pred_check_branch
      %62 = sbr.rel (0) target = $region29
    $region28: #{autoencoder_forward.1} parent=1 // pred_region
      %64 = dma.done [#allocation3], 7168
    $region29: #{autoencoder_forward.1} parent=1 // pred_fallthru
      _
    // Predicated region
    $region30: #{autoencoder_forward.1} parent=1 // pred_check
      _
    $region31: #{autoencoder_forward.1} parent=1 // pred_check_branch
      %66 = sbr.rel (0) target = $region33
    $region32: #{autoencoder_forward.1} parent=1 // pred_region
      %68 = dma.done [#allocation6], 8192
    $region33: #{autoencoder_forward.1} parent=1 // pred_fallthru
      _
    // Predicated region
    $region34: #{autoencoder_forward.1} parent=1 // pred_check
      _
    $region35: #{autoencoder_forward.1} parent=1 // pred_check_branch
      %70 = sbr.rel (0) target = $region37
    $region36: #{autoencoder_forward.1} parent=1 // pred_region
      %72 = dma.done [#allocation6], 7168
    $region37: #{autoencoder_forward.1} parent=1 // pred_fallthru
      _
    %v73 = vld [vmem:[%s0] sm:$0xff]
    %v74 = vld [vmem:[%s0 + $0x8] sm:$0xff]
    %v75 = vld [vmem:[%s0 + $0x10] sm:$0xff]
    %v76 = vld [vmem:[%s0 + $0x18] sm:$0xff]
    %v77 = vld [vmem:[%s0 + $0x20] sm:$0xff]
    %v78 = vld [vmem:[%s0 + $0x28] sm:$0xff]
    %v79 = vld [vmem:[%s0 + $0x30] sm:$0xff]
    %v80 = vld [vmem:[#allocation2] sm:$0xf]
    %v81 = vld [vmem:[#allocation2 + $0x4] sm:$0xf]
    %v82 = vld [vmem:[#allocation2 + $0x8] sm:$0xf]
    %v83 = vld [vmem:[#allocation2 + $0xc] sm:$0xf]
    %v84 = vld [vmem:[#allocation2 + $0x10] sm:$0xf]
    %v85 = vld [vmem:[#allocation2 + $0x14] sm:$0xf]
    %v86 = vld [vmem:[#allocation2 + $0x18] sm:$0xf]
    %v87 = vld [vmem:[#allocation2 + $0x1c] sm:$0xf]
    %v88 = vld [vmem:[#allocation2 + $0x20] sm:$0xf]
    %v89 = vld [vmem:[#allocation2 + $0x24] sm:$0xf]
    %v90 = vld [vmem:[#allocation2 + $0x28] sm:$0xf]
    %v91 = vld [vmem:[#allocation2 + $0x2c] sm:$0xf]
    %v92 = vld [vmem:[#allocation2 + $0x30] sm:$0xf]
    %v93 = vld [vmem:[#allocation2 + $0x34] sm:$0xf]
    %v94 = vld [vmem:[#allocation2 + $0x38] sm:$0xf]
    %v95 = vld [vmem:[#allocation2 + $0x3c] sm:$0xf]
    %v96 = vld [vmem:[#allocation2 + $0x40] sm:$0xf]
    %v97 = vld [vmem:[#allocation2 + $0x44] sm:$0xf]
    %v98 = vld [vmem:[#allocation2 + $0x48] sm:$0xf]
    %v99 = vld [vmem:[#allocation2 + $0x4c] sm:$0xf]
    %v100 = vld [vmem:[#allocation2 + $0x50] sm:$0xf]
    %v101 = vld [vmem:[#allocation2 + $0x54] sm:$0xf]
    %v102 = vld [vmem:[#allocation2 + $0x58] sm:$0xf]
    %v103 = vld [vmem:[#allocation2 + $0x5c] sm:$0xf]
    %v104 = vld [vmem:[#allocation2 + $0x60] sm:$0xf]
    %v105 = vld [vmem:[#allocation2 + $0x64] sm:$0xf]
    %v106 = vld [vmem:[#allocation2 + $0x68] sm:$0xf]
    %v107 = vld [vmem:[#allocation2 + $0x6c] sm:$0xf]
    %v108 = vld [vmem:[#allocation2 + $0x70] sm:$0xf]
    %v109 = vld [vmem:[#allocation2 + $0x74] sm:$0xf]
    %v110 = vld [vmem:[#allocation2 + $0x78] sm:$0xf]
    %v111 = vld [vmem:[#allocation2 + $0x7c] sm:$0xf]
    %v112 = vld [vmem:[#allocation2 + $0x80] sm:$0xf]
    %v113 = vld [vmem:[#allocation2 + $0x84] sm:$0xf]
    %v114 = vld [vmem:[#allocation2 + $0x88] sm:$0xf]
    %v115 = vld [vmem:[#allocation2 + $0x8c] sm:$0xf]
    %v116 = vld [vmem:[#allocation2 + $0x90] sm:$0xf]
    %v117 = vld [vmem:[#allocation2 + $0x94] sm:$0xf]
    %v118 = vld [vmem:[#allocation2 + $0x98] sm:$0xf]
    %v119 = vld [vmem:[#allocation2 + $0x9c] sm:$0xf]
    %v120 = vld [vmem:[#allocation2 + $0xa0] sm:$0xf]
    %v121 = vld [vmem:[#allocation2 + $0xa4] sm:$0xf]
    %v122 = vld [vmem:[#allocation2 + $0xa8] sm:$0xf]
    %v123 = vld [vmem:[#allocation2 + $0xac] sm:$0xf]
    %v124 = vld [vmem:[#allocation2 + $0xb0] sm:$0xf]
    %v125 = vld [vmem:[#allocation2 + $0xb4] sm:$0xf]
    %v126 = vld [vmem:[#allocation2 + $0xb8] sm:$0xf]
    %v127 = vld [vmem:[#allocation2 + $0xbc] sm:$0xf]
    %v128 = vld [vmem:[#allocation2 + $0xc0] sm:$0xf]
    %v129 = vld [vmem:[#allocation2 + $0xc4] sm:$0xf]
    %v130 = vld [vmem:[#allocation2 + $0xc8] sm:$0xf]
    %v131 = vld [vmem:[#allocation2 + $0xcc] sm:$0xf]
    %v132 = vld [vmem:[#allocation2 + $0xd0] sm:$0xf]
    %v133 = vld [vmem:[#allocation2 + $0xd4] sm:$0xf]
    %v134 = vld [vmem:[#allocation2 + $0xd8] sm:$0xf]
    %v135 = vld [vmem:[#allocation2 + $0xdc] sm:$0xf]
    %v136 = vld [vmem:[#allocation2 + $0xe0] sm:$0xf]
    %v137 = vld [vmem:[#allocation2 + $0xe4] sm:$0xf]
    %v138 = vld [vmem:[#allocation2 + $0xe8] sm:$0xf]
    %v139 = vld [vmem:[#allocation2 + $0xec] sm:$0xf]
    %v140 = vld [vmem:[#allocation2 + $0xf0] sm:$0xf]
    %v141 = vld [vmem:[#allocation2 + $0xf4] sm:$0xf]
    %v142 = vld [vmem:[#allocation2 + $0xf8] sm:$0xf]
    %v143 = vld [vmem:[#allocation2 + $0xfc] sm:$0xf]
    %v144 = vld [vmem:[#allocation2 + $0x100] sm:$0xf]
    %v145 = vld [vmem:[#allocation2 + $0x104] sm:$0xf]
    %v146 = vld [vmem:[#allocation2 + $0x108] sm:$0xf]
    %v147 = vld [vmem:[#allocation2 + $0x10c] sm:$0xf]
    %v148 = vld [vmem:[#allocation2 + $0x110] sm:$0xf]
    %v149 = vld [vmem:[#allocation2 + $0x114] sm:$0xf]
    %v150 = vld [vmem:[#allocation2 + $0x118] sm:$0xf]
    %v151 = vld [vmem:[#allocation2 + $0x11c] sm:$0xf]
    %v152 = vld [vmem:[#allocation2 + $0x120] sm:$0xf]
    %v153 = vld [vmem:[#allocation2 + $0x124] sm:$0xf]
    %v154 = vld [vmem:[#allocation2 + $0x128] sm:$0xf]
    %v155 = vld [vmem:[#allocation2 + $0x12c] sm:$0xf]
    %v156 = vld [vmem:[#allocation2 + $0x130] sm:$0xf]
    %v157 = vld [vmem:[#allocation2 + $0x134] sm:$0xf]
    %v158 = vld [vmem:[#allocation2 + $0x138] sm:$0xf]
    %v159 = vld [vmem:[#allocation2 + $0x13c] sm:$0xf]
    %v160 = vld [vmem:[#allocation2 + $0x140] sm:$0xf]
    %v161 = vld [vmem:[#allocation2 + $0x144] sm:$0xf]
    %v162 = vld [vmem:[#allocation2 + $0x148] sm:$0xf]
    %v163 = vld [vmem:[#allocation2 + $0x14c] sm:$0xf]
    %v164 = vld [vmem:[#allocation2 + $0x150] sm:$0xf]
    %v165 = vld [vmem:[#allocation2 + $0x154] sm:$0xf]
    %v166 = vld [vmem:[#allocation2 + $0x158] sm:$0xf]
    %v167 = vld [vmem:[#allocation2 + $0x15c] sm:$0xf]
    %v168 = vld [vmem:[#allocation2 + $0x160] sm:$0xf]
    %v169 = vld [vmem:[#allocation2 + $0x164] sm:$0xf]
    %v170 = vld [vmem:[#allocation2 + $0x168] sm:$0xf]
    %v171 = vld [vmem:[#allocation2 + $0x16c] sm:$0xf]
    %v172 = vld [vmem:[#allocation2 + $0x170] sm:$0xf]
    %v173 = vld [vmem:[#allocation2 + $0x174] sm:$0xf]
    %v174 = vld [vmem:[#allocation2 + $0x178] sm:$0xf]
    %v175 = vld [vmem:[#allocation2 + $0x17c] sm:$0xf]
    %v176 = vld [vmem:[#allocation2 + $0x180] sm:$0xf]
    %v177 = vld [vmem:[#allocation2 + $0x184] sm:$0xf]
    %v178 = vld [vmem:[#allocation2 + $0x188] sm:$0xf]
    %v179 = vld [vmem:[#allocation2 + $0x18c] sm:$0xf]
    %v180 = vld [vmem:[#allocation2 + $0x190] sm:$0xf]
    %v181 = vld [vmem:[#allocation2 + $0x194] sm:$0xf]
    %v182 = vld [vmem:[#allocation2 + $0x198] sm:$0xf]
    %v183 = vld [vmem:[#allocation2 + $0x19c] sm:$0xf]
    %v184 = vld [vmem:[#allocation2 + $0x1a0] sm:$0xf]
    %v185 = vld [vmem:[#allocation2 + $0x1a4] sm:$0xf]
    %v186 = vld [vmem:[#allocation2 + $0x1a8] sm:$0xf]
    %v187 = vld [vmem:[#allocation2 + $0x1ac] sm:$0xf]
    %v188 = vld [vmem:[#allocation2 + $0x1b0] sm:$0xf]
    %v189 = vld [vmem:[#allocation2 + $0x1b4] sm:$0xf]
    %v190 = vld [vmem:[#allocation2 + $0x1b8] sm:$0xf]
    %v191 = vld [vmem:[#allocation2 + $0x1bc] sm:$0xf]
    %v192 = vpack.c.bf16 %v73, %v73
    %v193 = vpack.c.bf16 %v74, %v74
    %v194 = vpack.c.bf16 %v75, %v75
    %v195 = vpack.c.bf16 %v76, %v76
    %v196 = vpack.c.bf16 %v77, %v77
    %v197 = vpack.c.bf16 %v78, %v78
    %v198 = vpack.c.bf16 %v79, %v79
    %v199 = vld [vmem:[%s4] sm:$0x1]
    %v200 = vperm.slane %v199, 0
    %v313 = vunpack.c.l.b16 %v80
    %v314 = vunpack.c.l.b16 %v81
    %v315 = vunpack.c.l.b16 %v82
    %v316 = vunpack.c.l.b16 %v83
    %v317 = vunpack.c.l.b16 %v84
    %v318 = vunpack.c.l.b16 %v85
    %v319 = vunpack.c.l.b16 %v86
    %v320 = vunpack.c.l.b16 %v87
    %v321 = vunpack.c.l.b16 %v88
    %v322 = vunpack.c.l.b16 %v89
    %v323 = vunpack.c.l.b16 %v90
    %v324 = vunpack.c.l.b16 %v91
    %v325 = vunpack.c.l.b16 %v92
    %v326 = vunpack.c.l.b16 %v93
    %v327 = vunpack.c.l.b16 %v94
    %v328 = vunpack.c.l.b16 %v95
    %v329 = vunpack.c.l.b16 %v96
    %v330 = vunpack.c.l.b16 %v97
    %v331 = vunpack.c.l.b16 %v98
    %v332 = vunpack.c.l.b16 %v99
    %v333 = vunpack.c.l.b16 %v100
    %v334 = vunpack.c.l.b16 %v101
    %v335 = vunpack.c.l.b16 %v102
    %v336 = vunpack.c.l.b16 %v103
    %v337 = vunpack.c.l.b16 %v104
    %v338 = vunpack.c.l.b16 %v105
    %v339 = vunpack.c.l.b16 %v106
    %v340 = vunpack.c.l.b16 %v107
    %v341 = vunpack.c.l.b16 %v108
    %v342 = vunpack.c.l.b16 %v109
    %v343 = vunpack.c.l.b16 %v110
    %v344 = vunpack.c.l.b16 %v111
    %v345 = vunpack.c.l.b16 %v112
    %v346 = vunpack.c.l.b16 %v113
    %v347 = vunpack.c.l.b16 %v114
    %v348 = vunpack.c.l.b16 %v115
    %v349 = vunpack.c.l.b16 %v116
    %v350 = vunpack.c.l.b16 %v117
    %v351 = vunpack.c.l.b16 %v118
    %v352 = vunpack.c.l.b16 %v119
    %v353 = vunpack.c.l.b16 %v120
    %v354 = vunpack.c.l.b16 %v121
    %v355 = vunpack.c.l.b16 %v122
    %v356 = vunpack.c.l.b16 %v123
    %v357 = vunpack.c.l.b16 %v124
    %v358 = vunpack.c.l.b16 %v125
    %v359 = vunpack.c.l.b16 %v126
    %v360 = vunpack.c.l.b16 %v127
    %v361 = vunpack.c.l.b16 %v128
    %v362 = vunpack.c.l.b16 %v129
    %v363 = vunpack.c.l.b16 %v130
    %v364 = vunpack.c.l.b16 %v131
    %v365 = vunpack.c.l.b16 %v132
    %v366 = vunpack.c.l.b16 %v133
    %v367 = vunpack.c.l.b16 %v134
    %v368 = vunpack.c.l.b16 %v135
    %v369 = vunpack.c.l.b16 %v136
    %v370 = vunpack.c.l.b16 %v137
    %v371 = vunpack.c.l.b16 %v138
    %v372 = vunpack.c.l.b16 %v139
    %v373 = vunpack.c.l.b16 %v140
    %v374 = vunpack.c.l.b16 %v141
    %v375 = vunpack.c.l.b16 %v142
    %v376 = vunpack.c.l.b16 %v143
    %v377 = vunpack.c.l.b16 %v144
    %v378 = vunpack.c.l.b16 %v145
    %v379 = vunpack.c.l.b16 %v146
    %v380 = vunpack.c.l.b16 %v147
    %v381 = vunpack.c.l.b16 %v148
    %v382 = vunpack.c.l.b16 %v149
    %v383 = vunpack.c.l.b16 %v150
    %v384 = vunpack.c.l.b16 %v151
    %v385 = vunpack.c.l.b16 %v152
    %v386 = vunpack.c.l.b16 %v153
    %v387 = vunpack.c.l.b16 %v154
    %v388 = vunpack.c.l.b16 %v155
    %v389 = vunpack.c.l.b16 %v156
    %v390 = vunpack.c.l.b16 %v157
    %v391 = vunpack.c.l.b16 %v158
    %v392 = vunpack.c.l.b16 %v159
    %v393 = vunpack.c.l.b16 %v160
    %v394 = vunpack.c.l.b16 %v161
    %v395 = vunpack.c.l.b16 %v162
    %v396 = vunpack.c.l.b16 %v163
    %v397 = vunpack.c.l.b16 %v164
    %v398 = vunpack.c.l.b16 %v165
    %v399 = vunpack.c.l.b16 %v166
    %v400 = vunpack.c.l.b16 %v167
    %v401 = vunpack.c.l.b16 %v168
    %v402 = vunpack.c.l.b16 %v169
    %v403 = vunpack.c.l.b16 %v170
    %v404 = vunpack.c.l.b16 %v171
    %v405 = vunpack.c.l.b16 %v172
    %v406 = vunpack.c.l.b16 %v173
    %v407 = vunpack.c.l.b16 %v174
    %v408 = vunpack.c.l.b16 %v175
    %v409 = vunpack.c.l.b16 %v176
    %v410 = vunpack.c.l.b16 %v177
    %v411 = vunpack.c.l.b16 %v178
    %v412 = vunpack.c.l.b16 %v179
    %v413 = vunpack.c.l.b16 %v180
    %v414 = vunpack.c.l.b16 %v181
    %v415 = vunpack.c.l.b16 %v182
    %v416 = vunpack.c.l.b16 %v183
    %v417 = vunpack.c.l.b16 %v184
    %v418 = vunpack.c.l.b16 %v185
    %v419 = vunpack.c.l.b16 %v186
    %v420 = vunpack.c.l.b16 %v187
    %v421 = vunpack.c.l.b16 %v188
    %v422 = vunpack.c.l.b16 %v189
    %v423 = vunpack.c.l.b16 %v190
    %v424 = vunpack.c.l.b16 %v191
    %v425 = vpack.c.b16 %v314, %v313
    %v426 = vpack.c.b16 %v316, %v315
    %v427 = vpack.c.b16 %v318, %v317
    %v428 = vpack.c.b16 %v320, %v319
    %v429 = vpack.c.b16 %v322, %v321
    %v430 = vpack.c.b16 %v324, %v323
    %v431 = vpack.c.b16 %v326, %v325
    %v432 = vpack.c.b16 %v328, %v327
    %v433 = vpack.c.b16 %v330, %v329
    %v434 = vpack.c.b16 %v332, %v331
    %v435 = vpack.c.b16 %v334, %v333
    %v436 = vpack.c.b16 %v336, %v335
    %v437 = vpack.c.b16 %v338, %v337
    %v438 = vpack.c.b16 %v340, %v339
    %v439 = vpack.c.b16 %v342, %v341
    %v440 = vpack.c.b16 %v344, %v343
    %v441 = vpack.c.b16 %v346, %v345
    %v442 = vpack.c.b16 %v348, %v347
    %v443 = vpack.c.b16 %v350, %v349
    %v444 = vpack.c.b16 %v352, %v351
    %v445 = vpack.c.b16 %v354, %v353
    %v446 = vpack.c.b16 %v356, %v355
    %v447 = vpack.c.b16 %v358, %v357
    %v448 = vpack.c.b16 %v360, %v359
    %v449 = vpack.c.b16 %v362, %v361
    %v450 = vpack.c.b16 %v364, %v363
    %v451 = vpack.c.b16 %v366, %v365
    %v452 = vpack.c.b16 %v368, %v367
    %v453 = vpack.c.b16 %v370, %v369
    %v454 = vpack.c.b16 %v372, %v371
    %v455 = vpack.c.b16 %v374, %v373
    %v456 = vpack.c.b16 %v376, %v375
    %v457 = vpack.c.b16 %v378, %v377
    %v458 = vpack.c.b16 %v380, %v379
    %v459 = vpack.c.b16 %v382, %v381
    %v460 = vpack.c.b16 %v384, %v383
    %v461 = vpack.c.b16 %v386, %v385
    %v462 = vpack.c.b16 %v388, %v387
    %v463 = vpack.c.b16 %v390, %v389
    %v464 = vpack.c.b16 %v392, %v391
    %v465 = vpack.c.b16 %v394, %v393
    %v466 = vpack.c.b16 %v396, %v395
    %v467 = vpack.c.b16 %v398, %v397
    %v468 = vpack.c.b16 %v400, %v399
    %v469 = vpack.c.b16 %v402, %v401
    %v470 = vpack.c.b16 %v404, %v403
    %v471 = vpack.c.b16 %v406, %v405
    %v472 = vpack.c.b16 %v408, %v407
    %v473 = vpack.c.b16 %v410, %v409
    %v474 = vpack.c.b16 %v412, %v411
    %v475 = vpack.c.b16 %v414, %v413
    %v476 = vpack.c.b16 %v416, %v415
    %v477 = vpack.c.b16 %v418, %v417
    %v478 = vpack.c.b16 %v420, %v419
    %v479 = vpack.c.b16 %v422, %v421
    %v480 = vpack.c.b16 %v424, %v423
    %537 = vmatpush.bf16.msra.mxu0 %v432
    %538 = vmatpush.bf16.msra.mxu0 %v431
    %539 = vmatpush.bf16.msra.mxu0 %v430
    %540 = vmatpush.bf16.msra.mxu0 %v429
    %541 = vmatpush.bf16.msra.mxu0 %v428
    %542 = vmatpush.bf16.msra.mxu0 %v427
    %543 = vmatpush.bf16.msra.mxu0 %v426
    %544 = vmatpush.bf16.msra.mxu0 %v425
    %545 = vmatmul.bf16.gmra.mxu0 %v192
    %v546 = vpop.f32.mrf.mxu0
    %v547 = vadd.f32 %v200, %v546
    %v548 = vpop.f32.mrf.mxu0
    %549 = vdwg.mxu0
    %550 = vmatpush.bf16.msra.mxu0 %v440
    %551 = vmatpush.bf16.msra.mxu0 %v439
    %552 = vmatpush.bf16.msra.mxu0 %v438
    %553 = vmatpush.bf16.msra.mxu0 %v437
    %554 = vmatpush.bf16.msra.mxu0 %v436
    %555 = vmatpush.bf16.msra.mxu0 %v435
    %556 = vmatpush.bf16.msra.mxu0 %v434
    %557 = vmatpush.bf16.msra.mxu0 %v433
    %558 = vmatmul.bf16.gmra.mxu0 %v193
    %v559 = vpop.f32.mrf.mxu0
    %v560 = vadd.f32 %v547, %v559
    %v561 = vpop.f32.mrf.mxu0
    %562 = vdwg.mxu0
    %563 = vmatpush.bf16.msra.mxu0 %v448
    %564 = vmatpush.bf16.msra.mxu0 %v447
    %565 = vmatpush.bf16.msra.mxu0 %v446
    %566 = vmatpush.bf16.msra.mxu0 %v445
    %567 = vmatpush.bf16.msra.mxu0 %v444
    %568 = vmatpush.bf16.msra.mxu0 %v443
    %569 = vmatpush.bf16.msra.mxu0 %v442
    %570 = vmatpush.bf16.msra.mxu0 %v441
    %571 = vmatmul.bf16.gmra.mxu0 %v194
    %v572 = vpop.f32.mrf.mxu0
    %v573 = vadd.f32 %v560, %v572
    %v574 = vpop.f32.mrf.mxu0
    %575 = vdwg.mxu0
    %576 = vmatpush.bf16.msra.mxu0 %v456
    %577 = vmatpush.bf16.msra.mxu0 %v455
    %578 = vmatpush.bf16.msra.mxu0 %v454
    %579 = vmatpush.bf16.msra.mxu0 %v453
    %580 = vmatpush.bf16.msra.mxu0 %v452
    %581 = vmatpush.bf16.msra.mxu0 %v451
    %582 = vmatpush.bf16.msra.mxu0 %v450
    %583 = vmatpush.bf16.msra.mxu0 %v449
    %584 = vmatmul.bf16.gmra.mxu0 %v195
    %v585 = vpop.f32.mrf.mxu0
    %v586 = vadd.f32 %v573, %v585
    %v587 = vpop.f32.mrf.mxu0
    %588 = vdwg.mxu0
    %589 = vmatpush.bf16.msra.mxu0 %v464
    %590 = vmatpush.bf16.msra.mxu0 %v463
    %591 = vmatpush.bf16.msra.mxu0 %v462
    %592 = vmatpush.bf16.msra.mxu0 %v461
    %593 = vmatpush.bf16.msra.mxu0 %v460
    %594 = vmatpush.bf16.msra.mxu0 %v459
    %595 = vmatpush.bf16.msra.mxu0 %v458
    %596 = vmatpush.bf16.msra.mxu0 %v457
    %597 = vmatmul.bf16.gmra.mxu0 %v196
    %v598 = vpop.f32.mrf.mxu0
    %v599 = vadd.f32 %v586, %v598
    %v600 = vpop.f32.mrf.mxu0
    %601 = vdwg.mxu0
    %602 = vmatpush.bf16.msra.mxu0 %v472
    %603 = vmatpush.bf16.msra.mxu0 %v471
    %604 = vmatpush.bf16.msra.mxu0 %v470
    %605 = vmatpush.bf16.msra.mxu0 %v469
    %606 = vmatpush.bf16.msra.mxu0 %v468
    %607 = vmatpush.bf16.msra.mxu0 %v467
    %608 = vmatpush.bf16.msra.mxu0 %v466
    %609 = vmatpush.bf16.msra.mxu0 %v465
    %610 = vmatmul.bf16.gmra.mxu0 %v197
    %v611 = vpop.f32.mrf.mxu0
    %v612 = vadd.f32 %v599, %v611
    %v613 = vpop.f32.mrf.mxu0
    %614 = vdwg.mxu0
    %615 = vmatpush.bf16.msra.mxu0 %v480
    %616 = vmatpush.bf16.msra.mxu0 %v479
    %617 = vmatpush.bf16.msra.mxu0 %v478
    %618 = vmatpush.bf16.msra.mxu0 %v477
    %619 = vmatpush.bf16.msra.mxu0 %v476
    %620 = vmatpush.bf16.msra.mxu0 %v475
    %621 = vmatpush.bf16.msra.mxu0 %v474
    %622 = vmatpush.bf16.msra.mxu0 %v473
    %623 = vmatmul.bf16.gmra.mxu0 %v198
    %v624 = vpop.f32.mrf.mxu0
    %v625 = vadd.f32 %v612, %v624
    %v626 = vpop.f32.mrf.mxu0
    %627 = vdwg.mxu0
    %v628 = vtanh.pop %v625
    %v629 = vld [vmem:[#allocation5] sm:$0xf]
    %v630 = vld [vmem:[#allocation5 + $0x4] sm:$0xf]
    %v631 = vld [vmem:[#allocation5 + $0x8] sm:$0xf]
    %v632 = vld [vmem:[#allocation5 + $0xc] sm:$0xf]
    %v633 = vld [vmem:[#allocation5 + $0x10] sm:$0xf]
    %v634 = vld [vmem:[#allocation5 + $0x14] sm:$0xf]
    %v635 = vld [vmem:[#allocation5 + $0x18] sm:$0xf]
    %v636 = vld [vmem:[#allocation5 + $0x1c] sm:$0xf]
    %v637 = vld [vmem:[#allocation5 + $0x20] sm:$0xf]
    %v638 = vld [vmem:[#allocation5 + $0x24] sm:$0xf]
    %v639 = vld [vmem:[#allocation5 + $0x28] sm:$0xf]
    %v640 = vld [vmem:[#allocation5 + $0x2c] sm:$0xf]
    %v641 = vld [vmem:[#allocation5 + $0x30] sm:$0xf]
    %v642 = vld [vmem:[#allocation5 + $0x34] sm:$0xf]
    %v643 = vld [vmem:[#allocation5 + $0x38] sm:$0xf]
    %v644 = vld [vmem:[#allocation5 + $0x3c] sm:$0xf]
    %v645 = vpack.c.bf16 %v628, %v628
    %v646 = vld [vmem:[%s4 + $0x1] sm:$0x1]
    %v647 = vperm.slane %v646, 0
    %v664 = vunpack.c.l.b16 %v629
    %v665 = vunpack.c.l.b16 %v630
    %v666 = vunpack.c.l.b16 %v631
    %v667 = vunpack.c.l.b16 %v632
    %v668 = vunpack.c.l.b16 %v633
    %v669 = vunpack.c.l.b16 %v634
    %v670 = vunpack.c.l.b16 %v635
    %v671 = vunpack.c.l.b16 %v636
    %v672 = vunpack.c.l.b16 %v637
    %v673 = vunpack.c.l.b16 %v638
    %v674 = vunpack.c.l.b16 %v639
    %v675 = vunpack.c.l.b16 %v640
    %v676 = vunpack.c.l.b16 %v641
    %v677 = vunpack.c.l.b16 %v642
    %v678 = vunpack.c.l.b16 %v643
    %v679 = vunpack.c.l.b16 %v644
    %v680 = vpack.c.b16 %v665, %v664
    %v681 = vpack.c.b16 %v667, %v666
    %v682 = vpack.c.b16 %v669, %v668
    %v683 = vpack.c.b16 %v671, %v670
    %v684 = vpack.c.b16 %v673, %v672
    %v685 = vpack.c.b16 %v675, %v674
    %v686 = vpack.c.b16 %v677, %v676
    %v687 = vpack.c.b16 %v679, %v678
    %696 = vmatpush.bf16.msra.mxu0 %v687
    %697 = vmatpush.bf16.msra.mxu0 %v686
    %698 = vmatpush.bf16.msra.mxu0 %v685
    %699 = vmatpush.bf16.msra.mxu0 %v684
    %700 = vmatpush.bf16.msra.mxu0 %v683
    %701 = vmatpush.bf16.msra.mxu0 %v682
    %702 = vmatpush.bf16.msra.mxu0 %v681
    %703 = vmatpush.bf16.msra.mxu0 %v680
    %704 = vmatmul.bf16.gmra.mxu0 %v645
    %v705 = vpop.f32.mrf.mxu0
    %v706 = vadd.f32 %v647, %v705
    %v707 = vpop.f32.mrf.mxu0
    %708 = vdwg.mxu0
    %v709 = vtanh.pop %v706
    %s710 = scalar_lea.vmem [#allocation5], 64
    %v711 = vld [vmem:[%s710] sm:$0xf]
    %v712 = vld [vmem:[%s710 + $0x4] sm:$0xf]
    %v713 = vld [vmem:[%s710 + $0x8] sm:$0xf]
    %v714 = vld [vmem:[%s710 + $0xc] sm:$0xf]
    %v715 = vld [vmem:[%s710 + $0x10] sm:$0xf]
    %v716 = vld [vmem:[%s710 + $0x14] sm:$0xf]
    %v717 = vld [vmem:[%s710 + $0x18] sm:$0xf]
    %v718 = vld [vmem:[%s710 + $0x1c] sm:$0xf]
    %v719 = vld [vmem:[%s710 + $0x20] sm:$0xf]
    %v720 = vld [vmem:[%s710 + $0x24] sm:$0xf]
    %v721 = vld [vmem:[%s710 + $0x28] sm:$0xf]
    %v722 = vld [vmem:[%s710 + $0x2c] sm:$0xf]
    %v723 = vld [vmem:[%s710 + $0x30] sm:$0xf]
    %v724 = vld [vmem:[%s710 + $0x34] sm:$0xf]
    %v725 = vld [vmem:[%s710 + $0x38] sm:$0xf]
    %v726 = vld [vmem:[%s710 + $0x3c] sm:$0xf]
    %v727 = vpack.c.bf16 %v709, %v709
    %v728 = vld [vmem:[%s4 + $0x2] sm:$0x1]
    %v729 = vperm.slane %v728, 0
    %v746 = vunpack.c.l.b16 %v711
    %v747 = vunpack.c.l.b16 %v712
    %v748 = vunpack.c.l.b16 %v713
    %v749 = vunpack.c.l.b16 %v714
    %v750 = vunpack.c.l.b16 %v715
    %v751 = vunpack.c.l.b16 %v716
    %v752 = vunpack.c.l.b16 %v717
    %v753 = vunpack.c.l.b16 %v718
    %v754 = vunpack.c.l.b16 %v719
    %v755 = vunpack.c.l.b16 %v720
    %v756 = vunpack.c.l.b16 %v721
    %v757 = vunpack.c.l.b16 %v722
    %v758 = vunpack.c.l.b16 %v723
    %v759 = vunpack.c.l.b16 %v724
    %v760 = vunpack.c.l.b16 %v725
    %v761 = vunpack.c.l.b16 %v726
    %v762 = vpack.c.b16 %v747, %v746
    %v763 = vpack.c.b16 %v749, %v748
    %v764 = vpack.c.b16 %v751, %v750
    %v765 = vpack.c.b16 %v753, %v752
    %v766 = vpack.c.b16 %v755, %v754
    %v767 = vpack.c.b16 %v757, %v756
    %v768 = vpack.c.b16 %v759, %v758
    %v769 = vpack.c.b16 %v761, %v760
    %778 = vmatpush.bf16.msra.mxu0 %v769
    %779 = vmatpush.bf16.msra.mxu0 %v768
    %780 = vmatpush.bf16.msra.mxu0 %v767
    %781 = vmatpush.bf16.msra.mxu0 %v766
    %782 = vmatpush.bf16.msra.mxu0 %v765
    %783 = vmatpush.bf16.msra.mxu0 %v764
    %784 = vmatpush.bf16.msra.mxu0 %v763
    %785 = vmatpush.bf16.msra.mxu0 %v762
    %786 = vmatmul.bf16.gmra.mxu0 %v727
    %v787 = vpop.f32.mrf.mxu0
    %v788 = vadd.f32 %v729, %v787
    %v789 = vpop.f32.mrf.mxu0
    %790 = vdwg.mxu0
    %v791 = vtanh.pop %v788
    %s792 = scalar_lea.vmem [#allocation5], 128
    %v793 = vld [vmem:[%s792] sm:$0xf]
    %v794 = vld [vmem:[%s792 + $0x4] sm:$0xf]
    %v795 = vld [vmem:[%s792 + $0x8] sm:$0xf]
    %v796 = vld [vmem:[%s792 + $0xc] sm:$0xf]
    %v797 = vld [vmem:[%s792 + $0x10] sm:$0xf]
    %v798 = vld [vmem:[%s792 + $0x14] sm:$0xf]
    %v799 = vld [vmem:[%s792 + $0x18] sm:$0xf]
    %v800 = vld [vmem:[%s792 + $0x1c] sm:$0xf]
    %v801 = vld [vmem:[%s792 + $0x20] sm:$0xf]
    %v802 = vld [vmem:[%s792 + $0x24] sm:$0xf]
    %v803 = vld [vmem:[%s792 + $0x28] sm:$0xf]
    %v804 = vld [vmem:[%s792 + $0x2c] sm:$0xf]
    %v805 = vld [vmem:[%s792 + $0x30] sm:$0xf]
    %v806 = vld [vmem:[%s792 + $0x34] sm:$0xf]
    %v807 = vld [vmem:[%s792 + $0x38] sm:$0xf]
    %v808 = vld [vmem:[%s792 + $0x3c] sm:$0xf]
    %v809 = vpack.c.bf16 %v791, %v791
    %v810 = vld [vmem:[%s4 + $0x3] sm:$0x1]
    %v811 = vperm.slane %v810, 0
    %v828 = vunpack.c.l.b16 %v793
    %v829 = vunpack.c.l.b16 %v794
    %v830 = vunpack.c.l.b16 %v795
    %v831 = vunpack.c.l.b16 %v796
    %v832 = vunpack.c.l.b16 %v797
    %v833 = vunpack.c.l.b16 %v798
    %v834 = vunpack.c.l.b16 %v799
    %v835 = vunpack.c.l.b16 %v800
    %v836 = vunpack.c.l.b16 %v801
    %v837 = vunpack.c.l.b16 %v802
    %v838 = vunpack.c.l.b16 %v803
    %v839 = vunpack.c.l.b16 %v804
    %v840 = vunpack.c.l.b16 %v805
    %v841 = vunpack.c.l.b16 %v806
    %v842 = vunpack.c.l.b16 %v807
    %v843 = vunpack.c.l.b16 %v808
    %v844 = vpack.c.b16 %v829, %v828
    %v845 = vpack.c.b16 %v831, %v830
    %v846 = vpack.c.b16 %v833, %v832
    %v847 = vpack.c.b16 %v835, %v834
    %v848 = vpack.c.b16 %v837, %v836
    %v849 = vpack.c.b16 %v839, %v838
    %v850 = vpack.c.b16 %v841, %v840
    %v851 = vpack.c.b16 %v843, %v842
    %860 = vmatpush.bf16.msra.mxu0 %v851
    %861 = vmatpush.bf16.msra.mxu0 %v850
    %862 = vmatpush.bf16.msra.mxu0 %v849
    %863 = vmatpush.bf16.msra.mxu0 %v848
    %864 = vmatpush.bf16.msra.mxu0 %v847
    %865 = vmatpush.bf16.msra.mxu0 %v846
    %866 = vmatpush.bf16.msra.mxu0 %v845
    %867 = vmatpush.bf16.msra.mxu0 %v844
    %868 = vmatmul.bf16.gmra.mxu0 %v809
    %v869 = vpop.f32.mrf.mxu0
    %v870 = vadd.f32 %v811, %v869
    %v871 = vpop.f32.mrf.mxu0
    %872 = vdwg.mxu0
    %v873 = vtanh.pop %v870
    %s874 = scalar_lea.vmem [#allocation5], 192
    %v875 = vld [vmem:[%s874] sm:$0xf]
    %v876 = vld [vmem:[%s874 + $0x4] sm:$0xf]
    %v877 = vld [vmem:[%s874 + $0x8] sm:$0xf]
    %v878 = vld [vmem:[%s874 + $0xc] sm:$0xf]
    %v879 = vld [vmem:[%s874 + $0x10] sm:$0xf]
    %v880 = vld [vmem:[%s874 + $0x14] sm:$0xf]
    %v881 = vld [vmem:[%s874 + $0x18] sm:$0xf]
    %v882 = vld [vmem:[%s874 + $0x1c] sm:$0xf]
    %v883 = vld [vmem:[%s874 + $0x20] sm:$0xf]
    %v884 = vld [vmem:[%s874 + $0x24] sm:$0xf]
    %v885 = vld [vmem:[%s874 + $0x28] sm:$0xf]
    %v886 = vld [vmem:[%s874 + $0x2c] sm:$0xf]
    %v887 = vld [vmem:[%s874 + $0x30] sm:$0xf]
    %v888 = vld [vmem:[%s874 + $0x34] sm:$0xf]
    %v889 = vld [vmem:[%s874 + $0x38] sm:$0xf]
    %v890 = vld [vmem:[%s874 + $0x3c] sm:$0xf]
    %v891 = vpack.c.bf16 %v873, %v873
    %v892 = vld [vmem:[%s4 + $0x4] sm:$0x1]
    %v893 = vperm.slane %v892, 0
    %v910 = vunpack.c.l.b16 %v875
    %v911 = vunpack.c.l.b16 %v876
    %v912 = vunpack.c.l.b16 %v877
    %v913 = vunpack.c.l.b16 %v878
    %v914 = vunpack.c.l.b16 %v879
    %v915 = vunpack.c.l.b16 %v880
    %v916 = vunpack.c.l.b16 %v881
    %v917 = vunpack.c.l.b16 %v882
    %v918 = vunpack.c.l.b16 %v883
    %v919 = vunpack.c.l.b16 %v884
    %v920 = vunpack.c.l.b16 %v885
    %v921 = vunpack.c.l.b16 %v886
    %v922 = vunpack.c.l.b16 %v887
    %v923 = vunpack.c.l.b16 %v888
    %v924 = vunpack.c.l.b16 %v889
    %v925 = vunpack.c.l.b16 %v890
    %v926 = vpack.c.b16 %v911, %v910
    %v927 = vpack.c.b16 %v913, %v912
    %v928 = vpack.c.b16 %v915, %v914
    %v929 = vpack.c.b16 %v917, %v916
    %v930 = vpack.c.b16 %v919, %v918
    %v931 = vpack.c.b16 %v921, %v920
    %v932 = vpack.c.b16 %v923, %v922
    %v933 = vpack.c.b16 %v925, %v924
    %942 = vmatpush.bf16.msra.mxu0 %v933
    %943 = vmatpush.bf16.msra.mxu0 %v932
    %944 = vmatpush.bf16.msra.mxu0 %v931
    %945 = vmatpush.bf16.msra.mxu0 %v930
    %946 = vmatpush.bf16.msra.mxu0 %v929
    %947 = vmatpush.bf16.msra.mxu0 %v928
    %948 = vmatpush.bf16.msra.mxu0 %v927
    %949 = vmatpush.bf16.msra.mxu0 %v926
    %950 = vmatmul.bf16.gmra.mxu0 %v891
    %v951 = vpop.f32.mrf.mxu0
    %v952 = vadd.f32 %v893, %v951
    %v953 = vpop.f32.mrf.mxu0
    %954 = vdwg.mxu0
    %955 = vst [vmem:[%s6] sm:$0xff] %v952
    %s956 = scalar_lea.vmem [#allocation5], 256
    %v957 = vld [vmem:[%s956] sm:$0xf]
    %v958 = vld [vmem:[%s956 + $0x4] sm:$0xf]
    %v959 = vld [vmem:[%s956 + $0x8] sm:$0xf]
    %v960 = vld [vmem:[%s956 + $0xc] sm:$0xf]
    %v961 = vld [vmem:[%s956 + $0x10] sm:$0xf]
    %v962 = vld [vmem:[%s956 + $0x14] sm:$0xf]
    %v963 = vld [vmem:[%s956 + $0x18] sm:$0xf]
    %v964 = vld [vmem:[%s956 + $0x1c] sm:$0xf]
    %v965 = vld [vmem:[%s956 + $0x20] sm:$0xf]
    %v966 = vld [vmem:[%s956 + $0x24] sm:$0xf]
    %v967 = vld [vmem:[%s956 + $0x28] sm:$0xf]
    %v968 = vld [vmem:[%s956 + $0x2c] sm:$0xf]
    %v969 = vld [vmem:[%s956 + $0x30] sm:$0xf]
    %v970 = vld [vmem:[%s956 + $0x34] sm:$0xf]
    %v971 = vld [vmem:[%s956 + $0x38] sm:$0xf]
    %v972 = vld [vmem:[%s956 + $0x3c] sm:$0xf]
    %v973 = vpack.c.bf16 %v952, %v952
    %v974 = vld [vmem:[%s4 + $0x5] sm:$0x1]
    %v975 = vperm.slane %v974, 0
    %v992 = vunpack.c.l.b16 %v957
    %v993 = vunpack.c.l.b16 %v958
    %v994 = vunpack.c.l.b16 %v959
    %v995 = vunpack.c.l.b16 %v960
    %v996 = vunpack.c.l.b16 %v961
    %v997 = vunpack.c.l.b16 %v962
    %v998 = vunpack.c.l.b16 %v963
    %v999 = vunpack.c.l.b16 %v964
    %v1000 = vunpack.c.l.b16 %v965
    %v1001 = vunpack.c.l.b16 %v966
    %v1002 = vunpack.c.l.b16 %v967
    %v1003 = vunpack.c.l.b16 %v968
    %v1004 = vunpack.c.l.b16 %v969
    %v1005 = vunpack.c.l.b16 %v970
    %v1006 = vunpack.c.l.b16 %v971
    %v1007 = vunpack.c.l.b16 %v972
    %v1008 = vpack.c.b16 %v993, %v992
    %v1009 = vpack.c.b16 %v995, %v994
    %v1010 = vpack.c.b16 %v997, %v996
    %v1011 = vpack.c.b16 %v999, %v998
    %v1012 = vpack.c.b16 %v1001, %v1000
    %v1013 = vpack.c.b16 %v1003, %v1002
    %v1014 = vpack.c.b16 %v1005, %v1004
    %v1015 = vpack.c.b16 %v1007, %v1006
    %1024 = vmatpush.bf16.msra.mxu0 %v1015
    %1025 = vmatpush.bf16.msra.mxu0 %v1014
    %1026 = vmatpush.bf16.msra.mxu0 %v1013
    %1027 = vmatpush.bf16.msra.mxu0 %v1012
    %1028 = vmatpush.bf16.msra.mxu0 %v1011
    %1029 = vmatpush.bf16.msra.mxu0 %v1010
    %1030 = vmatpush.bf16.msra.mxu0 %v1009
    %1031 = vmatpush.bf16.msra.mxu0 %v1008
    %1032 = vmatmul.bf16.gmra.mxu0 %v973
    %v1033 = vpop.f32.mrf.mxu0
    %v1034 = vadd.f32 %v975, %v1033
    %v1035 = vpop.f32.mrf.mxu0
    %1036 = vdwg.mxu0
    %v1037 = vtanh.pop %v1034
    %s1038 = scalar_lea.vmem [#allocation5], 320
    %v1039 = vld [vmem:[%s1038] sm:$0xf]
    %v1040 = vld [vmem:[%s1038 + $0x4] sm:$0xf]
    %v1041 = vld [vmem:[%s1038 + $0x8] sm:$0xf]
    %v1042 = vld [vmem:[%s1038 + $0xc] sm:$0xf]
    %v1043 = vld [vmem:[%s1038 + $0x10] sm:$0xf]
    %v1044 = vld [vmem:[%s1038 + $0x14] sm:$0xf]
    %v1045 = vld [vmem:[%s1038 + $0x18] sm:$0xf]
    %v1046 = vld [vmem:[%s1038 + $0x1c] sm:$0xf]
    %v1047 = vld [vmem:[%s1038 + $0x20] sm:$0xf]
    %v1048 = vld [vmem:[%s1038 + $0x24] sm:$0xf]
    %v1049 = vld [vmem:[%s1038 + $0x28] sm:$0xf]
    %v1050 = vld [vmem:[%s1038 + $0x2c] sm:$0xf]
    %v1051 = vld [vmem:[%s1038 + $0x30] sm:$0xf]
    %v1052 = vld [vmem:[%s1038 + $0x34] sm:$0xf]
    %v1053 = vld [vmem:[%s1038 + $0x38] sm:$0xf]
    %v1054 = vld [vmem:[%s1038 + $0x3c] sm:$0xf]
    %v1055 = vpack.c.bf16 %v1037, %v1037
    %v1056 = vld [vmem:[%s4 + $0x6] sm:$0x1]
    %v1057 = vperm.slane %v1056, 0
    %v1074 = vunpack.c.l.b16 %v1039
    %v1075 = vunpack.c.l.b16 %v1040
    %v1076 = vunpack.c.l.b16 %v1041
    %v1077 = vunpack.c.l.b16 %v1042
    %v1078 = vunpack.c.l.b16 %v1043
    %v1079 = vunpack.c.l.b16 %v1044
    %v1080 = vunpack.c.l.b16 %v1045
    %v1081 = vunpack.c.l.b16 %v1046
    %v1082 = vunpack.c.l.b16 %v1047
    %v1083 = vunpack.c.l.b16 %v1048
    %v1084 = vunpack.c.l.b16 %v1049
    %v1085 = vunpack.c.l.b16 %v1050
    %v1086 = vunpack.c.l.b16 %v1051
    %v1087 = vunpack.c.l.b16 %v1052
    %v1088 = vunpack.c.l.b16 %v1053
    %v1089 = vunpack.c.l.b16 %v1054
    %v1090 = vpack.c.b16 %v1075, %v1074
    %v1091 = vpack.c.b16 %v1077, %v1076
    %v1092 = vpack.c.b16 %v1079, %v1078
    %v1093 = vpack.c.b16 %v1081, %v1080
    %v1094 = vpack.c.b16 %v1083, %v1082
    %v1095 = vpack.c.b16 %v1085, %v1084
    %v1096 = vpack.c.b16 %v1087, %v1086
    %v1097 = vpack.c.b16 %v1089, %v1088
    %1106 = vmatpush.bf16.msra.mxu0 %v1097
    %1107 = vmatpush.bf16.msra.mxu0 %v1096
    %1108 = vmatpush.bf16.msra.mxu0 %v1095
    %1109 = vmatpush.bf16.msra.mxu0 %v1094
    %1110 = vmatpush.bf16.msra.mxu0 %v1093
    %1111 = vmatpush.bf16.msra.mxu0 %v1092
    %1112 = vmatpush.bf16.msra.mxu0 %v1091
    %1113 = vmatpush.bf16.msra.mxu0 %v1090
    %1114 = vmatmul.bf16.gmra.mxu0 %v1055
    %v1115 = vpop.f32.mrf.mxu0
    %v1116 = vadd.f32 %v1057, %v1115
    %v1117 = vpop.f32.mrf.mxu0
    %1118 = vdwg.mxu0
    %v1119 = vtanh.pop %v1116
    %s1120 = scalar_lea.vmem [#allocation5], 384
    %v1121 = vld [vmem:[%s1120] sm:$0xf]
    %v1122 = vld [vmem:[%s1120 + $0x4] sm:$0xf]
    %v1123 = vld [vmem:[%s1120 + $0x8] sm:$0xf]
    %v1124 = vld [vmem:[%s1120 + $0xc] sm:$0xf]
    %v1125 = vld [vmem:[%s1120 + $0x10] sm:$0xf]
    %v1126 = vld [vmem:[%s1120 + $0x14] sm:$0xf]
    %v1127 = vld [vmem:[%s1120 + $0x18] sm:$0xf]
    %v1128 = vld [vmem:[%s1120 + $0x1c] sm:$0xf]
    %v1129 = vld [vmem:[%s1120 + $0x20] sm:$0xf]
    %v1130 = vld [vmem:[%s1120 + $0x24] sm:$0xf]
    %v1131 = vld [vmem:[%s1120 + $0x28] sm:$0xf]
    %v1132 = vld [vmem:[%s1120 + $0x2c] sm:$0xf]
    %v1133 = vld [vmem:[%s1120 + $0x30] sm:$0xf]
    %v1134 = vld [vmem:[%s1120 + $0x34] sm:$0xf]
    %v1135 = vld [vmem:[%s1120 + $0x38] sm:$0xf]
    %v1136 = vld [vmem:[%s1120 + $0x3c] sm:$0xf]
    %v1137 = vpack.c.bf16 %v1119, %v1119
    %v1138 = vld [vmem:[%s4 + $0x7] sm:$0x1]
    %v1139 = vperm.slane %v1138, 0
    %v1156 = vunpack.c.l.b16 %v1121
    %v1157 = vunpack.c.l.b16 %v1122
    %v1158 = vunpack.c.l.b16 %v1123
    %v1159 = vunpack.c.l.b16 %v1124
    %v1160 = vunpack.c.l.b16 %v1125
    %v1161 = vunpack.c.l.b16 %v1126
    %v1162 = vunpack.c.l.b16 %v1127
    %v1163 = vunpack.c.l.b16 %v1128
    %v1164 = vunpack.c.l.b16 %v1129
    %v1165 = vunpack.c.l.b16 %v1130
    %v1166 = vunpack.c.l.b16 %v1131
    %v1167 = vunpack.c.l.b16 %v1132
    %v1168 = vunpack.c.l.b16 %v1133
    %v1169 = vunpack.c.l.b16 %v1134
    %v1170 = vunpack.c.l.b16 %v1135
    %v1171 = vunpack.c.l.b16 %v1136
    %v1172 = vpack.c.b16 %v1157, %v1156
    %v1173 = vpack.c.b16 %v1159, %v1158
    %v1174 = vpack.c.b16 %v1161, %v1160
    %v1175 = vpack.c.b16 %v1163, %v1162
    %v1176 = vpack.c.b16 %v1165, %v1164
    %v1177 = vpack.c.b16 %v1167, %v1166
    %v1178 = vpack.c.b16 %v1169, %v1168
    %v1179 = vpack.c.b16 %v1171, %v1170
    %1188 = vmatpush.bf16.msra.mxu0 %v1179
    %1189 = vmatpush.bf16.msra.mxu0 %v1178
    %1190 = vmatpush.bf16.msra.mxu0 %v1177
    %1191 = vmatpush.bf16.msra.mxu0 %v1176
    %1192 = vmatpush.bf16.msra.mxu0 %v1175
    %1193 = vmatpush.bf16.msra.mxu0 %v1174
    %1194 = vmatpush.bf16.msra.mxu0 %v1173
    %1195 = vmatpush.bf16.msra.mxu0 %v1172
    %1196 = vmatmul.bf16.gmra.mxu0 %v1137
    %v1197 = vpop.f32.mrf.mxu0
    %v1198 = vadd.f32 %v1139, %v1197
    %v1199 = vpop.f32.mrf.mxu0
    %1200 = vdwg.mxu0
    %v1201 = vtanh.pop %v1198
    %s1202 = scalar_lea.vmem [#allocation5], 448
    %v1203 = vld [vmem:[%s1202] sm:$0xf]
    %v1204 = vld [vmem:[%s1202 + $0x4] sm:$0xf]
    %v1205 = vld [vmem:[%s1202 + $0x8] sm:$0xf]
    %v1206 = vld [vmem:[%s1202 + $0xc] sm:$0xf]
    %v1207 = vld [vmem:[%s1202 + $0x10] sm:$0xf]
    %v1208 = vld [vmem:[%s1202 + $0x14] sm:$0xf]
    %v1209 = vld [vmem:[%s1202 + $0x18] sm:$0xf]
    %v1210 = vld [vmem:[%s1202 + $0x1c] sm:$0xf]
    %v1211 = vld [vmem:[%s1202 + $0x20] sm:$0xf]
    %v1212 = vld [vmem:[%s1202 + $0x24] sm:$0xf]
    %v1213 = vld [vmem:[%s1202 + $0x28] sm:$0xf]
    %v1214 = vld [vmem:[%s1202 + $0x2c] sm:$0xf]
    %v1215 = vld [vmem:[%s1202 + $0x30] sm:$0xf]
    %v1216 = vld [vmem:[%s1202 + $0x34] sm:$0xf]
    %v1217 = vld [vmem:[%s1202 + $0x38] sm:$0xf]
    %v1218 = vld [vmem:[%s1202 + $0x3c] sm:$0xf]
    %v1219 = vpack.c.bf16 %v1201, %v1201
    %v1220 = vld [vmem:[%s4 + $0x8] sm:$0x1]
    %v1221 = vperm.slane %v1220, 0
    %v1238 = vunpack.c.l.b16 %v1203
    %v1239 = vunpack.c.l.b16 %v1204
    %v1240 = vunpack.c.l.b16 %v1205
    %v1241 = vunpack.c.l.b16 %v1206
    %v1242 = vunpack.c.l.b16 %v1207
    %v1243 = vunpack.c.l.b16 %v1208
    %v1244 = vunpack.c.l.b16 %v1209
    %v1245 = vunpack.c.l.b16 %v1210
    %v1246 = vunpack.c.l.b16 %v1211
    %v1247 = vunpack.c.l.b16 %v1212
    %v1248 = vunpack.c.l.b16 %v1213
    %v1249 = vunpack.c.l.b16 %v1214
    %v1250 = vunpack.c.l.b16 %v1215
    %v1251 = vunpack.c.l.b16 %v1216
    %v1252 = vunpack.c.l.b16 %v1217
    %v1253 = vunpack.c.l.b16 %v1218
    %v1254 = vpack.c.b16 %v1239, %v1238
    %v1255 = vpack.c.b16 %v1241, %v1240
    %v1256 = vpack.c.b16 %v1243, %v1242
    %v1257 = vpack.c.b16 %v1245, %v1244
    %v1258 = vpack.c.b16 %v1247, %v1246
    %v1259 = vpack.c.b16 %v1249, %v1248
    %v1260 = vpack.c.b16 %v1251, %v1250
    %v1261 = vpack.c.b16 %v1253, %v1252
    %1270 = vmatpush.bf16.msra.mxu0 %v1261
    %1271 = vmatpush.bf16.msra.mxu0 %v1260
    %1272 = vmatpush.bf16.msra.mxu0 %v1259
    %1273 = vmatpush.bf16.msra.mxu0 %v1258
    %1274 = vmatpush.bf16.msra.mxu0 %v1257
    %1275 = vmatpush.bf16.msra.mxu0 %v1256
    %1276 = vmatpush.bf16.msra.mxu0 %v1255
    %1277 = vmatpush.bf16.msra.mxu0 %v1254
    %1278 = vmatmul.bf16.gmra.mxu0 %v1219
    %v1279 = vpop.f32.mrf.mxu0
    %v1280 = vadd.f32 %v1221, %v1279
    %v1281 = vpop.f32.mrf.mxu0
    %1282 = vdwg.mxu0
    %v1283 = vtanh.pop %v1280
    %v1284 = vld [vmem:[#allocation7] sm:$0xff]
    %v1285 = vld [vmem:[#allocation7 + $0x8] sm:$0xff]
    %v1286 = vld [vmem:[#allocation7 + $0x10] sm:$0xff]
    %v1287 = vld [vmem:[#allocation7 + $0x18] sm:$0xf]
    %v1288 = vld [vmem:[#allocation7 + $0x1c] sm:$0xff]
    %v1289 = vld [vmem:[#allocation7 + $0x24] sm:$0xff]
    %v1290 = vld [vmem:[#allocation7 + $0x2c] sm:$0xff]
    %v1291 = vld [vmem:[#allocation7 + $0x34] sm:$0xf]
    %v1292 = vld [vmem:[#allocation7 + $0x38] sm:$0xff]
    %v1293 = vld [vmem:[#allocation7 + $0x40] sm:$0xff]
    %v1294 = vld [vmem:[#allocation7 + $0x48] sm:$0xff]
    %v1295 = vld [vmem:[#allocation7 + $0x50] sm:$0xf]
    %v1296 = vld [vmem:[#allocation7 + $0x54] sm:$0xff]
    %v1297 = vld [vmem:[#allocation7 + $0x5c] sm:$0xff]
    %v1298 = vld [vmem:[#allocation7 + $0x64] sm:$0xff]
    %v1299 = vld [vmem:[#allocation7 + $0x6c] sm:$0xf]
    %v1300 = vld [vmem:[#allocation7 + $0x70] sm:$0xff]
    %v1301 = vld [vmem:[#allocation7 + $0x78] sm:$0xff]
    %v1302 = vld [vmem:[#allocation7 + $0x80] sm:$0xff]
    %v1303 = vld [vmem:[#allocation7 + $0x88] sm:$0xf]
    %v1304 = vld [vmem:[#allocation7 + $0x8c] sm:$0xff]
    %v1305 = vld [vmem:[#allocation7 + $0x94] sm:$0xff]
    %v1306 = vld [vmem:[#allocation7 + $0x9c] sm:$0xff]
    %v1307 = vld [vmem:[#allocation7 + $0xa4] sm:$0xf]
    %v1308 = vld [vmem:[#allocation7 + $0xa8] sm:$0xff]
    %v1309 = vld [vmem:[#allocation7 + $0xb0] sm:$0xff]
    %v1310 = vld [vmem:[#allocation7 + $0xb8] sm:$0xff]
    %v1311 = vld [vmem:[#allocation7 + $0xc0] sm:$0xf]
    %v1312 = vld [vmem:[#allocation7 + $0xc4] sm:$0xff]
    %v1313 = vld [vmem:[#allocation7 + $0xcc] sm:$0xff]
    %v1314 = vld [vmem:[#allocation7 + $0xd4] sm:$0xff]
    %v1315 = vld [vmem:[#allocation7 + $0xdc] sm:$0xf]
    %v1316 = vld [vmem:[#allocation7 + $0xe0] sm:$0xff]
    %v1317 = vld [vmem:[#allocation7 + $0xe8] sm:$0xff]
    %v1318 = vld [vmem:[#allocation7 + $0xf0] sm:$0xff]
    %v1319 = vld [vmem:[#allocation7 + $0xf8] sm:$0xf]
    %v1320 = vld [vmem:[#allocation7 + $0xfc] sm:$0xff]
    %v1321 = vld [vmem:[#allocation7 + $0x104] sm:$0xff]
    %v1322 = vld [vmem:[#allocation7 + $0x10c] sm:$0xff]
    %v1323 = vld [vmem:[#allocation7 + $0x114] sm:$0xf]
    %v1324 = vld [vmem:[#allocation7 + $0x118] sm:$0xff]
    %v1325 = vld [vmem:[#allocation7 + $0x120] sm:$0xff]
    %v1326 = vld [vmem:[#allocation7 + $0x128] sm:$0xff]
    %v1327 = vld [vmem:[#allocation7 + $0x130] sm:$0xf]
    %v1328 = vld [vmem:[#allocation7 + $0x134] sm:$0xff]
    %v1329 = vld [vmem:[#allocation7 + $0x13c] sm:$0xff]
    %v1330 = vld [vmem:[#allocation7 + $0x144] sm:$0xff]
    %v1331 = vld [vmem:[#allocation7 + $0x14c] sm:$0xf]
    %v1332 = vld [vmem:[#allocation7 + $0x150] sm:$0xff]
    %v1333 = vld [vmem:[#allocation7 + $0x158] sm:$0xff]
    %v1334 = vld [vmem:[#allocation7 + $0x160] sm:$0xff]
    %v1335 = vld [vmem:[#allocation7 + $0x168] sm:$0xf]
    %v1336 = vld [vmem:[#allocation7 + $0x16c] sm:$0xff]
    %v1337 = vld [vmem:[#allocation7 + $0x174] sm:$0xff]
    %v1338 = vld [vmem:[#allocation7 + $0x17c] sm:$0xff]
    %v1339 = vld [vmem:[#allocation7 + $0x184] sm:$0xf]
    %v1340 = vld [vmem:[#allocation7 + $0x188] sm:$0xff]
    %v1341 = vld [vmem:[#allocation7 + $0x190] sm:$0xff]
    %v1342 = vld [vmem:[#allocation7 + $0x198] sm:$0xff]
    %v1343 = vld [vmem:[#allocation7 + $0x1a0] sm:$0xf]
    %v1344 = vld [vmem:[#allocation7 + $0x1a4] sm:$0xff]
    %v1345 = vld [vmem:[#allocation7 + $0x1ac] sm:$0xff]
    %v1346 = vld [vmem:[#allocation7 + $0x1b4] sm:$0xff]
    %v1347 = vld [vmem:[#allocation7 + $0x1bc] sm:$0xf]
    %v1348 = vpack.c.bf16 %v1283, %v1283
    %v1349 = vld [vmem:[%s5] sm:$0xff]
    %v1351 = vperm.slane %v1349, 0
    %v1352 = vperm.slane %v1349, 1
    %v1353 = vperm.slane %v1349, 2
    %v1354 = vperm.slane %v1349, 3
    %v1355 = vperm.slane %v1349, 4
    %v1356 = vperm.slane %v1349, 5
    %v1357 = vperm.slane %v1349, 6
    %v1429 = vunpack.c.l.b16 %v1284
    %v1430 = vunpack.c.h.b16 %v1284
    %v1431 = vunpack.c.l.b16 %v1285
    %v1432 = vunpack.c.h.b16 %v1285
    %v1433 = vunpack.c.l.b16 %v1286
    %v1434 = vunpack.c.h.b16 %v1286
    %v1435 = vunpack.c.l.b16 %v1287
    %v1436 = vunpack.c.l.b16 %v1288
    %v1437 = vunpack.c.h.b16 %v1288
    %v1438 = vunpack.c.l.b16 %v1289
    %v1439 = vunpack.c.h.b16 %v1289
    %v1440 = vunpack.c.l.b16 %v1290
    %v1441 = vunpack.c.h.b16 %v1290
    %v1442 = vunpack.c.l.b16 %v1291
    %v1443 = vunpack.c.l.b16 %v1292
    %v1444 = vunpack.c.h.b16 %v1292
    %v1445 = vunpack.c.l.b16 %v1293
    %v1446 = vunpack.c.h.b16 %v1293
    %v1447 = vunpack.c.l.b16 %v1294
    %v1448 = vunpack.c.h.b16 %v1294
    %v1449 = vunpack.c.l.b16 %v1295
    %v1450 = vunpack.c.l.b16 %v1296
    %v1451 = vunpack.c.h.b16 %v1296
    %v1452 = vunpack.c.l.b16 %v1297
    %v1453 = vunpack.c.h.b16 %v1297
    %v1454 = vunpack.c.l.b16 %v1298
    %v1455 = vunpack.c.h.b16 %v1298
    %v1456 = vunpack.c.l.b16 %v1299
    %v1457 = vunpack.c.l.b16 %v1300
    %v1458 = vunpack.c.h.b16 %v1300
    %v1459 = vunpack.c.l.b16 %v1301
    %v1460 = vunpack.c.h.b16 %v1301
    %v1461 = vunpack.c.l.b16 %v1302
    %v1462 = vunpack.c.h.b16 %v1302
    %v1463 = vunpack.c.l.b16 %v1303
    %v1464 = vunpack.c.l.b16 %v1304
    %v1465 = vunpack.c.h.b16 %v1304
    %v1466 = vunpack.c.l.b16 %v1305
    %v1467 = vunpack.c.h.b16 %v1305
    %v1468 = vunpack.c.l.b16 %v1306
    %v1469 = vunpack.c.h.b16 %v1306
    %v1470 = vunpack.c.l.b16 %v1307
    %v1471 = vunpack.c.l.b16 %v1308
    %v1472 = vunpack.c.h.b16 %v1308
    %v1473 = vunpack.c.l.b16 %v1309
    %v1474 = vunpack.c.h.b16 %v1309
    %v1475 = vunpack.c.l.b16 %v1310
    %v1476 = vunpack.c.h.b16 %v1310
    %v1477 = vunpack.c.l.b16 %v1311
    %v1478 = vunpack.c.l.b16 %v1312
    %v1479 = vunpack.c.h.b16 %v1312
    %v1480 = vunpack.c.l.b16 %v1313
    %v1481 = vunpack.c.h.b16 %v1313
    %v1482 = vunpack.c.l.b16 %v1314
    %v1483 = vunpack.c.h.b16 %v1314
    %v1484 = vunpack.c.l.b16 %v1315
    %v1485 = vunpack.c.l.b16 %v1316
    %v1486 = vunpack.c.h.b16 %v1316
    %v1487 = vunpack.c.l.b16 %v1317
    %v1488 = vunpack.c.h.b16 %v1317
    %v1489 = vunpack.c.l.b16 %v1318
    %v1490 = vunpack.c.h.b16 %v1318
    %v1491 = vunpack.c.l.b16 %v1319
    %v1492 = vunpack.c.l.b16 %v1320
    %v1493 = vunpack.c.h.b16 %v1320
    %v1494 = vunpack.c.l.b16 %v1321
    %v1495 = vunpack.c.h.b16 %v1321
    %v1496 = vunpack.c.l.b16 %v1322
    %v1497 = vunpack.c.h.b16 %v1322
    %v1498 = vunpack.c.l.b16 %v1323
    %v1499 = vunpack.c.l.b16 %v1324
    %v1500 = vunpack.c.h.b16 %v1324
    %v1501 = vunpack.c.l.b16 %v1325
    %v1502 = vunpack.c.h.b16 %v1325
    %v1503 = vunpack.c.l.b16 %v1326
    %v1504 = vunpack.c.h.b16 %v1326
    %v1505 = vunpack.c.l.b16 %v1327
    %v1506 = vunpack.c.l.b16 %v1328
    %v1507 = vunpack.c.h.b16 %v1328
    %v1508 = vunpack.c.l.b16 %v1329
    %v1509 = vunpack.c.h.b16 %v1329
    %v1510 = vunpack.c.l.b16 %v1330
    %v1511 = vunpack.c.h.b16 %v1330
    %v1512 = vunpack.c.l.b16 %v1331
    %v1513 = vunpack.c.l.b16 %v1332
    %v1514 = vunpack.c.h.b16 %v1332
    %v1515 = vunpack.c.l.b16 %v1333
    %v1516 = vunpack.c.h.b16 %v1333
    %v1517 = vunpack.c.l.b16 %v1334
    %v1518 = vunpack.c.h.b16 %v1334
    %v1519 = vunpack.c.l.b16 %v1335
    %v1520 = vunpack.c.l.b16 %v1336
    %v1521 = vunpack.c.h.b16 %v1336
    %v1522 = vunpack.c.l.b16 %v1337
    %v1523 = vunpack.c.h.b16 %v1337
    %v1524 = vunpack.c.l.b16 %v1338
    %v1525 = vunpack.c.h.b16 %v1338
    %v1526 = vunpack.c.l.b16 %v1339
    %v1527 = vunpack.c.l.b16 %v1340
    %v1528 = vunpack.c.h.b16 %v1340
    %v1529 = vunpack.c.l.b16 %v1341
    %v1530 = vunpack.c.h.b16 %v1341
    %v1531 = vunpack.c.l.b16 %v1342
    %v1532 = vunpack.c.h.b16 %v1342
    %v1533 = vunpack.c.l.b16 %v1343
    %v1534 = vunpack.c.l.b16 %v1344
    %v1535 = vunpack.c.h.b16 %v1344
    %v1536 = vunpack.c.l.b16 %v1345
    %v1537 = vunpack.c.h.b16 %v1345
    %v1538 = vunpack.c.l.b16 %v1346
    %v1539 = vunpack.c.h.b16 %v1346
    %v1540 = vunpack.c.l.b16 %v1347
    %v1541 = vpack.c.b16 %v1436, %v1429
    %v1542 = vpack.c.b16 %v1437, %v1430
    %v1543 = vpack.c.b16 %v1438, %v1431
    %v1544 = vpack.c.b16 %v1439, %v1432
    %v1545 = vpack.c.b16 %v1440, %v1433
    %v1546 = vpack.c.b16 %v1441, %v1434
    %v1547 = vpack.c.b16 %v1442, %v1435
    %v1548 = vpack.c.b16 %v1450, %v1443
    %v1549 = vpack.c.b16 %v1451, %v1444
    %v1550 = vpack.c.b16 %v1452, %v1445
    %v1551 = vpack.c.b16 %v1453, %v1446
    %v1552 = vpack.c.b16 %v1454, %v1447
    %v1553 = vpack.c.b16 %v1455, %v1448
    %v1554 = vpack.c.b16 %v1456, %v1449
    %v1555 = vpack.c.b16 %v1464, %v1457
    %v1556 = vpack.c.b16 %v1465, %v1458
    %v1557 = vpack.c.b16 %v1466, %v1459
    %v1558 = vpack.c.b16 %v1467, %v1460
    %v1559 = vpack.c.b16 %v1468, %v1461
    %v1560 = vpack.c.b16 %v1469, %v1462
    %v1561 = vpack.c.b16 %v1470, %v1463
    %v1562 = vpack.c.b16 %v1478, %v1471
    %v1563 = vpack.c.b16 %v1479, %v1472
    %v1564 = vpack.c.b16 %v1480, %v1473
    %v1565 = vpack.c.b16 %v1481, %v1474
    %v1566 = vpack.c.b16 %v1482, %v1475
    %v1567 = vpack.c.b16 %v1483, %v1476
    %v1568 = vpack.c.b16 %v1484, %v1477
    %v1569 = vpack.c.b16 %v1492, %v1485
    %v1570 = vpack.c.b16 %v1493, %v1486
    %v1571 = vpack.c.b16 %v1494, %v1487
    %v1572 = vpack.c.b16 %v1495, %v1488
    %v1573 = vpack.c.b16 %v1496, %v1489
    %v1574 = vpack.c.b16 %v1497, %v1490
    %v1575 = vpack.c.b16 %v1498, %v1491
    %v1576 = vpack.c.b16 %v1506, %v1499
    %v1577 = vpack.c.b16 %v1507, %v1500
    %v1578 = vpack.c.b16 %v1508, %v1501
    %v1579 = vpack.c.b16 %v1509, %v1502
    %v1580 = vpack.c.b16 %v1510, %v1503
    %v1581 = vpack.c.b16 %v1511, %v1504
    %v1582 = vpack.c.b16 %v1512, %v1505
    %v1583 = vpack.c.b16 %v1520, %v1513
    %v1584 = vpack.c.b16 %v1521, %v1514
    %v1585 = vpack.c.b16 %v1522, %v1515
    %v1586 = vpack.c.b16 %v1523, %v1516
    %v1587 = vpack.c.b16 %v1524, %v1517
    %v1588 = vpack.c.b16 %v1525, %v1518
    %v1589 = vpack.c.b16 %v1526, %v1519
    %v1590 = vpack.c.b16 %v1534, %v1527
    %v1591 = vpack.c.b16 %v1535, %v1528
    %v1592 = vpack.c.b16 %v1536, %v1529
    %v1593 = vpack.c.b16 %v1537, %v1530
    %v1594 = vpack.c.b16 %v1538, %v1531
    %v1595 = vpack.c.b16 %v1539, %v1532
    %v1596 = vpack.c.b16 %v1540, %v1533
    %1653 = vmatpush.bf16.msra.mxu0 %v1590
    %1654 = vmatpush.bf16.msra.mxu0 %v1583
    %1655 = vmatpush.bf16.msra.mxu0 %v1576
    %1656 = vmatpush.bf16.msra.mxu0 %v1569
    %1657 = vmatpush.bf16.msra.mxu0 %v1562
    %1658 = vmatpush.bf16.msra.mxu0 %v1555
    %1659 = vmatpush.bf16.msra.mxu0 %v1548
    %1660 = vmatpush.bf16.msra.mxu0 %v1541
    %1661 = vmatmul.bf16.gmra.mxu0 %v1348
    %v1662 = vpop.f32.mrf.mxu0
    %v1663 = vadd.f32 %v1351, %v1662
    %v1664 = vpop.f32.mrf.mxu0
    %1665 = vdwg.mxu0
    %1666 = vmatpush.bf16.msra.mxu0 %v1591
    %1667 = vmatpush.bf16.msra.mxu0 %v1584
    %1668 = vmatpush.bf16.msra.mxu0 %v1577
    %1669 = vmatpush.bf16.msra.mxu0 %v1570
    %1670 = vmatpush.bf16.msra.mxu0 %v1563
    %1671 = vmatpush.bf16.msra.mxu0 %v1556
    %1672 = vmatpush.bf16.msra.mxu0 %v1549
    %1673 = vmatpush.bf16.msra.mxu0 %v1542
    %1674 = vmatmul.bf16.gmra.mxu0 %v1348
    %v1675 = vpop.f32.mrf.mxu0
    %v1676 = vadd.f32 %v1352, %v1675
    %v1677 = vpop.f32.mrf.mxu0
    %1678 = vdwg.mxu0
    %1679 = vmatpush.bf16.msra.mxu0 %v1592
    %1680 = vmatpush.bf16.msra.mxu0 %v1585
    %1681 = vmatpush.bf16.msra.mxu0 %v1578
    %1682 = vmatpush.bf16.msra.mxu0 %v1571
    %1683 = vmatpush.bf16.msra.mxu0 %v1564
    %1684 = vmatpush.bf16.msra.mxu0 %v1557
    %1685 = vmatpush.bf16.msra.mxu0 %v1550
    %1686 = vmatpush.bf16.msra.mxu0 %v1543
    %1687 = vmatmul.bf16.gmra.mxu0 %v1348
    %v1688 = vpop.f32.mrf.mxu0
    %v1689 = vadd.f32 %v1353, %v1688
    %v1690 = vpop.f32.mrf.mxu0
    %1691 = vdwg.mxu0
    %1692 = vmatpush.bf16.msra.mxu0 %v1593
    %1693 = vmatpush.bf16.msra.mxu0 %v1586
    %1694 = vmatpush.bf16.msra.mxu0 %v1579
    %1695 = vmatpush.bf16.msra.mxu0 %v1572
    %1696 = vmatpush.bf16.msra.mxu0 %v1565
    %1697 = vmatpush.bf16.msra.mxu0 %v1558
    %1698 = vmatpush.bf16.msra.mxu0 %v1551
    %1699 = vmatpush.bf16.msra.mxu0 %v1544
    %1700 = vmatmul.bf16.gmra.mxu0 %v1348
    %v1701 = vpop.f32.mrf.mxu0
    %v1702 = vadd.f32 %v1354, %v1701
    %v1703 = vpop.f32.mrf.mxu0
    %1704 = vdwg.mxu0
    %1705 = vmatpush.bf16.msra.mxu0 %v1594
    %1706 = vmatpush.bf16.msra.mxu0 %v1587
    %1707 = vmatpush.bf16.msra.mxu0 %v1580
    %1708 = vmatpush.bf16.msra.mxu0 %v1573
    %1709 = vmatpush.bf16.msra.mxu0 %v1566
    %1710 = vmatpush.bf16.msra.mxu0 %v1559
    %1711 = vmatpush.bf16.msra.mxu0 %v1552
    %1712 = vmatpush.bf16.msra.mxu0 %v1545
    %1713 = vmatmul.bf16.gmra.mxu0 %v1348
    %v1714 = vpop.f32.mrf.mxu0
    %v1715 = vadd.f32 %v1355, %v1714
    %v1716 = vpop.f32.mrf.mxu0
    %1717 = vdwg.mxu0
    %1718 = vmatpush.bf16.msra.mxu0 %v1595
    %1719 = vmatpush.bf16.msra.mxu0 %v1588
    %1720 = vmatpush.bf16.msra.mxu0 %v1581
    %1721 = vmatpush.bf16.msra.mxu0 %v1574
    %1722 = vmatpush.bf16.msra.mxu0 %v1567
    %1723 = vmatpush.bf16.msra.mxu0 %v1560
    %1724 = vmatpush.bf16.msra.mxu0 %v1553
    %1725 = vmatpush.bf16.msra.mxu0 %v1546
    %1726 = vmatmul.bf16.gmra.mxu0 %v1348
    %v1727 = vpop.f32.mrf.mxu0
    %v1728 = vadd.f32 %v1356, %v1727
    %v1729 = vpop.f32.mrf.mxu0
    %1730 = vdwg.mxu0
    %1731 = vmatpush.bf16.msra.mxu0 %v1596
    %1732 = vmatpush.bf16.msra.mxu0 %v1589
    %1733 = vmatpush.bf16.msra.mxu0 %v1582
    %1734 = vmatpush.bf16.msra.mxu0 %v1575
    %1735 = vmatpush.bf16.msra.mxu0 %v1568
    %1736 = vmatpush.bf16.msra.mxu0 %v1561
    %1737 = vmatpush.bf16.msra.mxu0 %v1554
    %1738 = vmatpush.bf16.msra.mxu0 %v1547
    %1739 = vmatmul.bf16.gmra.mxu0 %v1348
    %v1740 = vpop.f32.mrf.mxu0
    %v1741 = vadd.f32 %v1357, %v1740
    %v1742 = vpop.f32.mrf.mxu0
    %1743 = vdwg.mxu0
    %v1744 = vsub.f32 0.0, %v1663
    %v1745 = vsub.f32 0.0, %v1676
    %v1746 = vsub.f32 0.0, %v1689
    %v1747 = vsub.f32 0.0, %v1702
    %v1748 = vsub.f32 0.0, %v1715
    %v1749 = vsub.f32 0.0, %v1728
    %v1750 = vsub.f32 0.0, %v1741
    %v1751 = vmul.f32 %v1744, 1.442695
    %v1752 = vpow.pop %v1751
    %v1753 = vmul.f32 %v1745, 1.442695
    %v1754 = vpow.pop %v1753
    %v1755 = vmul.f32 %v1746, 1.442695
    %v1756 = vpow.pop %v1755
    %v1757 = vmul.f32 %v1747, 1.442695
    %v1758 = vpow.pop %v1757
    %v1759 = vmul.f32 %v1748, 1.442695
    %v1760 = vpow.pop %v1759
    %v1761 = vmul.f32 %v1749, 1.442695
    %v1762 = vpow.pop %v1761
    %v1763 = vmul.f32 %v1750, 1.442695
    %v1764 = vpow.pop %v1763
    %v1765 = vadd.f32 %v1752, 1.0
    %v1766 = vadd.f32 %v1754, 1.0
    %v1767 = vadd.f32 %v1756, 1.0
    %v1768 = vadd.f32 %v1758, 1.0
    %v1769 = vadd.f32 %v1760, 1.0
    %v1770 = vadd.f32 %v1762, 1.0
    %v1771 = vadd.f32 %v1764, 1.0
    %v1772 = vrcp.pop %v1765
    %v1773 = vrcp.pop %v1766
    %v1774 = vrcp.pop %v1767
    %v1775 = vrcp.pop %v1768
    %v1776 = vrcp.pop %v1769
    %v1777 = vrcp.pop %v1770
    %v1778 = vrcp.pop %v1771
    %1779 = vst [vmem:[#allocation8] sm:$0xff] %v1772
    %1780 = vst [vmem:[#allocation8 + $0x8] sm:$0xff] %v1773
    %1781 = vst [vmem:[#allocation8 + $0x10] sm:$0xff] %v1774
    %1782 = vst [vmem:[#allocation8 + $0x18] sm:$0xff] %v1775
    %1783 = vst [vmem:[#allocation8 + $0x20] sm:$0xff] %v1776
    %1784 = vst [vmem:[#allocation8 + $0x28] sm:$0xff] %v1777
    %1785 = vst [vmem:[#allocation8 + $0x30] sm:$0xff] %v1778
    // Predicated region
    $region38: #{autoencoder_forward.1} parent=1 // pred_check
      _
    $region39: #{autoencoder_forward.1} parent=1 // pred_check_branch
      %1787 = sbr.rel (0) target = $region41
    $region40: #{autoencoder_forward.1} parent=1 // pred_region
      _
    $region41: #{autoencoder_forward.1} parent=1 // pred_fallthru
      _
    // Predicated region
    $region42: #{autoencoder_forward.1} parent=1 // pred_check
      _
    $region43: #{autoencoder_forward.1} parent=1 // pred_check_branch
      %1789 = sbr.rel (0) target = $region45
    $region44: #{autoencoder_forward.1} parent=1 // pred_region
      %1791 = vsyncadd [#allocation4], 0
      %s1793 = sshll.u32 [#allocation8], 4
      %s1794 = int_to_ptr.vmem [resolvable:$true] %s1793
      %s1795 = sshll.u32 %s7, 4
      %s1796 = int_to_ptr.hbm [resolvable:$true] %s1795
      %1798 = dma.vmem_to_hbm [thread:$0]  %s1794, 896, %s1796, [#allocation4]
    $region45: #{autoencoder_forward.1} parent=1 // pred_fallthru
      _
    // Predicated region
    $region46: #{autoencoder_forward.1} parent=1 // pred_check
      _
    $region47: #{autoencoder_forward.1} parent=1 // pred_check_branch
      %1800 = sbr.rel (0) target = $region49
    $region48: #{autoencoder_forward.1} parent=1 // pred_region
      _
    $region49: #{autoencoder_forward.1} parent=1 // pred_fallthru
      _
    // Predicated region
    $region50: #{autoencoder_forward.1} parent=1 // pred_check
      _
    $region51: #{autoencoder_forward.1} parent=1 // pred_check_branch
      %1802 = sbr.rel (0) target = $region53
    $region52: #{autoencoder_forward.1} parent=1 // pred_region
      %1804 = dma.done [#allocation4], 896
    $region53: #{autoencoder_forward.1} parent=1 // pred_fallthru
      _
    %1805 = vsyncpa [#allocation3], 1
    %1806 = vsyncpa [#allocation6], 1
    %1807 = vsyncpa [#allocation4], 1

</llo_original>
